<compile_context>
chip_gen: v5e
topology: v5e:2x2
jax: 0.10.0
libtpu: 0.0.40
codegen_flags: <defaults>
</compile_context>

<pallas_src>
import functools
import math

import jax
import jax.numpy as jnp
from jax.experimental import pallas as pl
from jax.experimental.pallas import tpu as pltpu

BN_EPS = 1e-5


# ----------------------------------------------------------------------------
# Fused Pallas kernel: conv1 -> conv2 -> conv3 -> flatten -> fc1 -> fc2
# ----------------------------------------------------------------------------
def tempcnn_fused_kernel(x_ref,
                         w1_ref, s1_ref, t1_ref,
                         w2_ref, s2_ref, t2_ref,
                         w3_ref, s3_ref, t3_ref,
                         wf1_ref, bf1_ref,
                         wf2_ref, bf2_ref,
                         o_ref,
                         cols1_ref, cols23_ref, flat_ref,
                         *, BB, L, K, D, H):
    """One batch tile (BB elements) of the whole TempCNN forward.

    x_ref:      (BB*L, D)       channels-last input rows (row = b*L + l)
    w{1,2,3}:   (K*Cin, H)      conv weights, row index = k*Cin + ci
    s/t{1,2,3}: (1, H)          fused BN scale / (BN shift + conv bias) terms
    wf1:        (L*H, 4H)       dense1 weight, rows permuted to l*H + c order,
                                BN scale folded into columns
    bf1:        (1, 4H)         dense1 fused bias (b*scale + shift)
    wf2:        (4H, NC), bf2: (1, NC)
    o_ref:      (BB, NC)
    cols1:      (BB*L, K*D)     im2col scratch, layer 1
    cols23:     (BB*L, K*H)     im2col scratch, layers 2 & 3
    flat:       (BB, L*H)       flatten scratch
    """
    P = K // 2

    # Zero im2col scratch: the boundary ('same' padding) regions stay zero,
    # interior regions are fully rewritten below.
    cols1_ref[...] = jnp.zeros_like(cols1_ref)
    cols23_ref[...] = jnp.zeros_like(cols23_ref)

    def im2col_store(cols_ref, src, cin):
        # src: (BB*L, cin) value.  cols[b*L + l, k*cin + ci] = src[b*L + l + k - P, ci]
        # (zero where the window runs off the sequence edge).
        for b in range(BB):
            for k in range(K):
                lo = max(0, P - k)          # first output row with a valid tap
                hi = min(L, L + P - k)      # one past the last
                n = hi - lo
                if n <= 0:
                    continue
                s = lo + k - P              # source start row within the batch
                cols_ref[b * L + lo:b * L + hi, k * cin:(k + 1) * cin] = (
                    src[b * L + s:b * L + s + n, :])

    def conv(cols_ref, w_ref, s_ref, t_ref):
        # One MXU matmul per conv layer + fused BN/ReLU epilogue (f32).
        z = jnp.dot(cols_ref[...], w_ref[...], preferred_element_type=jnp.float32)
        z = z * s_ref[...] + t_ref[...]
        return jnp.maximum(z, 0.0)

    # conv block 1
    im2col_store(cols1_ref, x_ref[...], D)
    h = conv(cols1_ref, w1_ref, s1_ref, t1_ref)          # (BB*L, H)
    # conv block 2
    im2col_store(cols23_ref, h, H)
    h = conv(cols23_ref, w2_ref, s2_ref, t2_ref)         # (BB*L, H)
    # conv block 3
    im2col_store(cols23_ref, h, H)
    h = conv(cols23_ref, w3_ref, s3_ref, t3_ref)         # (BB*L, H)

    # flatten: flat[b, l*H + c] = h[b*L + l, c]   (dense1 weight was permuted
    # offline to consume exactly this channels-last order).
    for b in range(BB):
        for l in range(L):
            flat_ref[b:b + 1, l * H:(l + 1) * H] = h[b * L + l:b * L + l + 1, :]

    z1 = jnp.dot(flat_ref[...], wf1_ref[...], preferred_element_type=jnp.float32)
    z1 = jnp.maximum(z1 + bf1_ref[...], 0.0)             # dense1 + BN + ReLU
    out = jnp.dot(z1, wf2_ref[...], preferred_element_type=jnp.float32) + bf2_ref[...]
    o_ref[...] = out.astype(o_ref.dtype)


# ----------------------------------------------------------------------------
# Wrapper
# ----------------------------------------------------------------------------
def _pick_batch_block(B):
    if B <= 8:
        return B
    for bb in (32, 16, 8):          # keep blocks 8-aligned for the BlockSpecs
        if B % bb == 0:
            return bb
    return B


def tempcnn_forward(x, pp, batch_block=None):
    """x: (B, L, D) — same layout the PyTorch module is called with."""
    B, L, D = x.shape
    H = pp["w1"].shape[1]
    K = pp["w1"].shape[0] // D
    F1 = pp["wf1"].shape[1]
    NC = pp["wf2"].shape[1]

    BB = _pick_batch_block(B) if batch_block is None else batch_block
    nb = B // BB
    x2d = x.reshape(B * L, D)                      # free host-side reshape

    def _full(a):
        return pl.BlockSpec(a.shape, lambda i: (0,) * a.ndim)

    args = (x2d,
            pp["w1"], pp["s1"], pp["t1"],
            pp["w2"], pp["s2"], pp["t2"],
            pp["w3"], pp["s3"], pp["t3"],
            pp["wf1"], pp["bf1"], pp["wf2"], pp["bf2"])
    in_specs = [pl.BlockSpec((BB * L, D), lambda i: (i, 0))]
    in_specs += [_full(a) for a in args[1:]]

    kernel = functools.partial(tempcnn_fused_kernel, BB=BB, L=L, K=K, D=D, H=H)
    out = pl.pallas_call(
        kernel,
        out_shape=jax.ShapeDtypeStruct((B, NC), jnp.float32),
        grid=(nb,),
        in_specs=in_specs,
        out_specs=pl.BlockSpec((BB, NC), lambda i: (i, 0)),
        scratch_shapes=[
            pltpu.VMEM((BB * L, K * D), jnp.float32),   # im2col, layer 1
            pltpu.VMEM((BB * L, K * H), jnp.float32),   # im2col, layers 2/3
            pltpu.VMEM((BB, L * H), jnp.float32),       # flatten buffer
        ],
        compiler_params=pltpu.CompilerParams(dimension_semantics=("parallel",)),
    )(*args)
    return jnp.squeeze(out, -1) if NC == 1 else out      # torch .squeeze(-1)


# ----------------------------------------------------------------------------
# Parameters (deterministic init, PyTorch-like shapes) + offline folding
# ----------------------------------------------------------------------------
def _bn_params(keys, c):
    k1, k2, k3, k4 = keys
    return dict(
        gamma=1.0 + 0.1 * jax.random.normal(k1, (c,), jnp.float32),
        beta=0.1 * jax.random.normal(k2, (c,), jnp.float32),
        mean=0.1 * jax.random.normal(k3, (c,), jnp.float32),
        var=0.5 + jnp.abs(jax.random.normal(k4, (c,), jnp.float32)),
    )


def init_tempcnn_params(key, input_dim, hidden, seqlen, kernel_size, num_classes):
    keys = iter(jax.random.split(key, 64))

    def conv_layer(cin, cout, ks):
        lim = 1.0 / math.sqrt(cin * ks)
        p = dict(
            w=jax.random.uniform(next(keys), (cout, cin, ks), jnp.float32, -lim, lim),
            b=jax.random.uniform(next(keys), (cout,), jnp.float32, -lim, lim),
        )
        p.update(_bn_params([next(keys) for _ in range(4)], cout))
        return p

    def fc_layer(fin, fout, with_bn):
        lim = 1.0 / math.sqrt(fin)
        p = dict(
            w=jax.random.uniform(next(keys), (fout, fin), jnp.float32, -lim, lim),
            b=jax.random.uniform(next(keys), (fout,), jnp.float32, -lim, lim),
        )
        if with_bn:
            p.update(_bn_params([next(keys) for _ in range(4)], fout))
        return p

    return dict(
        convs=[
            conv_layer(input_dim, hidden, kernel_size),
            conv_layer(hidden, hidden, kernel_size),
            conv_layer(hidden, hidden, kernel_size),
        ],
        dense1=fc_layer(hidden * seqlen, 4 * hidden, True),
        dense2=fc_layer(4 * hidden, num_classes, False),
    )


def pack_params(params, seqlen):
    """One-time offline folding: BN+bias into scale/shift, weight reshapes,
    and the Flatten permutation into dense1's weight rows."""
    packed = {}
    for i, p in enumerate(params["convs"], start=1):
        cout, cin, K = p["w"].shape
        scale = p["gamma"] / jnp.sqrt(p["var"] + BN_EPS)
        shift = p["beta"] - p["mean"] * scale + p["b"] * scale   # conv bias folded
        w = jnp.transpose(p["w"], (2, 1, 0)).reshape(K * cin, cout)  # row = k*cin+ci
        packed[f"w{i}"] = w
        packed[f"s{i}"] = scale.reshape(1, cout)
        packed[f"t{i}"] = shift.reshape(1, cout)

    H = params["convs"][0]["w"].shape[0]
    d1 = params["dense1"]
    F1 = d1["w"].shape[0]
    scale = d1["gamma"] / jnp.sqrt(d1["var"] + BN_EPS)
    shift = d1["beta"] - d1["mean"] * scale
    # torch Flatten of (B, C, L): feature index = c*L + l ; kernel uses l*H + c.
    wf1 = jnp.transpose(d1["w"].reshape(F1, H, seqlen), (2, 1, 0)).reshape(seqlen * H, F1)
    packed["wf1"] = wf1 * scale[None, :]                  # BN scale folded into weight
    packed["bf1"] = (d1["b"] * scale + shift).reshape(1, F1)

    d2 = params["dense2"]
    packed["wf2"] = jnp.transpose(d2["w"])
    packed["bf2"] = d2["b"].reshape(1, -1)
    return packed


# ----------------------------------------------------------------------------
# Pure-JAX reference (lax conv, NCL layout like PyTorch)
# ----------------------------------------------------------------------------
def _bn_affine(p):
    scale = p["gamma"] / jnp.sqrt(p["var"] + BN_EPS)
    shift = p["beta"] - p["mean"] * scale
    return scale, shift


def tempcnn_reference(x, params):
    h = jnp.transpose(x, (0, 2, 1))                       # (B, D, L)
    for p in params["convs"]:
        pad = p["w"].shape[-1] // 2
        y = jax.lax.conv_general_dilated(
            h, p["w"], window_strides=(1,), padding=[(pad, pad)],
            dimension_numbers=("NCH", "OIH", "NCH"))
        y = y + p["b"][None, :, None]
        scale, shift = _bn_affine(p)
        y = y * scale[None, :, None] + shift[None, :, None]
        h = jnp.maximum(y, 0.0)
    B = h.shape[0]
    flat = h.reshape(B, -1)
    p = params["dense1"]
    z = flat @ p["w"].T + p["b"]
    scale, shift = _bn_affine(p)
    z = jnp.maximum(z * scale + shift, 0.0)
    p = params["dense2"]
    out = z @ p["w"].T + p["b"]
    return out[:, 0]


# ----------------------------------------------------------------------------
if __name__ == "__main__":
    # Small shapes consistent with TempCNN(input_dim, num_classes, seqlen, k, hidden)
    B, INPUT_DIM, SEQLEN, KSIZE, HIDDEN, NUM_CLASSES = 2, 4, 16, 5, 32, 1

    key = jax.random.PRNGKey(0)
    k_params, k_x = jax.random.split(key)
    params = init_tempcnn_params(k_params, INPUT_DIM, HIDDEN, SEQLEN, KSIZE, NUM_CLASSES)
    x = jax.random.normal(k_x, (B, SEQLEN, INPUT_DIM), jnp.float32)

    packed = pack_params(params, SEQLEN)      # one-time offline weight folding

    fwd = jax.jit(tempcnn_forward)
    out = jax.block_until_ready(fwd(x, packed))
    ref = jax.block_until_ready(tempcnn_reference(x, params))

    assert out.shape == (B,), out.shape
    err = float(jnp.max(jnp.abs(out - ref)))
    assert err < 1e-3, f"max abs error {err}"
    print("KERNEL_OK")
</pallas_src>

<mosaic_0001>
module attributes {stable_mosaic.version = 11 : i64} {
  func.func @tempcnn_fused_kernel(%arg0: i32, %arg1: memref<32x4xf32, #tpu.memory_space<vmem>>, %arg2: memref<20x32xf32, #tpu.memory_space<vmem>>, %arg3: memref<1x32xf32, #tpu.memory_space<vmem>>, %arg4: memref<1x32xf32, #tpu.memory_space<vmem>>, %arg5: memref<160x32xf32, #tpu.memory_space<vmem>>, %arg6: memref<1x32xf32, #tpu.memory_space<vmem>>, %arg7: memref<1x32xf32, #tpu.memory_space<vmem>>, %arg8: memref<160x32xf32, #tpu.memory_space<vmem>>, %arg9: memref<1x32xf32, #tpu.memory_space<vmem>>, %arg10: memref<1x32xf32, #tpu.memory_space<vmem>>, %arg11: memref<512x128xf32, #tpu.memory_space<vmem>>, %arg12: memref<1x128xf32, #tpu.memory_space<vmem>>, %arg13: memref<128x1xf32, #tpu.memory_space<vmem>>, %arg14: memref<1x1xf32, #tpu.memory_space<vmem>>, %arg15: memref<2x1xf32, #tpu.memory_space<vmem>>, %arg16: memref<32x20xf32, #tpu.memory_space<vmem>>, %arg17: memref<32x160xf32, #tpu.memory_space<vmem>>, %arg18: memref<2x512xf32, #tpu.memory_space<vmem>>) attributes {dimension_semantics = [#tpu.dimension_semantics<parallel>], iteration_bounds = array<i64: 1>, scalar_prefetch = 0 : i64, scratch_operands = 3 : i64, tpu.core_type = #tpu.core_type<tc>, window_params = [{transform_indices = @transform_0, window_bounds = array<i64: 32, 4>}, {pipeline_mode = #tpu.pipeline_mode<synchronous>, transform_indices = @transform_1, window_bounds = array<i64: 20, 32>}, {pipeline_mode = #tpu.pipeline_mode<synchronous>, transform_indices = @transform_2, window_bounds = array<i64: 1, 32>}, {pipeline_mode = #tpu.pipeline_mode<synchronous>, transform_indices = @transform_3, window_bounds = array<i64: 1, 32>}, {pipeline_mode = #tpu.pipeline_mode<synchronous>, transform_indices = @transform_4, window_bounds = array<i64: 160, 32>}, {pipeline_mode = #tpu.pipeline_mode<synchronous>, transform_indices = @transform_5, window_bounds = array<i64: 1, 32>}, {pipeline_mode = #tpu.pipeline_mode<synchronous>, transform_indices = @transform_6, window_bounds = array<i64: 1, 32>}, {pipeline_mode = #tpu.pipeline_mode<synchronous>, transform_indices = @transform_7, window_bounds = array<i64: 160, 32>}, {pipeline_mode = #tpu.pipeline_mode<synchronous>, transform_indices = @transform_8, window_bounds = array<i64: 1, 32>}, {pipeline_mode = #tpu.pipeline_mode<synchronous>, transform_indices = @transform_9, window_bounds = array<i64: 1, 32>}, {pipeline_mode = #tpu.pipeline_mode<synchronous>, transform_indices = @transform_10, window_bounds = array<i64: 512, 128>}, {pipeline_mode = #tpu.pipeline_mode<synchronous>, transform_indices = @transform_11, window_bounds = array<i64: 1, 128>}, {pipeline_mode = #tpu.pipeline_mode<synchronous>, transform_indices = @transform_12, window_bounds = array<i64: 128, 1>}, {pipeline_mode = #tpu.pipeline_mode<synchronous>, transform_indices = @transform_13, window_bounds = array<i64: 1, 1>}, {transform_indices = @transform_14, window_bounds = array<i64: 2, 1>}]} {
    %cst = arith.constant 0.000000e+00 : f32
    %0 = vector.broadcast %cst : f32 to vector<32x20xf32>
    %c0 = arith.constant 0 : index
    %c0_0 = arith.constant 0 : index
    %1 = vector.load %arg16[%c0, %c0_0] : memref<32x20xf32, #tpu.memory_space<vmem>>, vector<32x20xf32>
    tpu.vector_store %arg16[%c0, %c0_0], %0 {strides = array<i32>} : memref<32x20xf32, #tpu.memory_space<vmem>>, vector<32x20xf32>,
    %cst_1 = arith.constant 0.000000e+00 : f32
    %2 = vector.broadcast %cst_1 : f32 to vector<32x160xf32>
    %c0_2 = arith.constant 0 : index
    %c0_3 = arith.constant 0 : index
    %3 = vector.load %arg17[%c0_2, %c0_3] : memref<32x160xf32, #tpu.memory_space<vmem>>, vector<32x160xf32>
    tpu.vector_store %arg17[%c0_2, %c0_3], %2 {strides = array<i32>} : memref<32x160xf32, #tpu.memory_space<vmem>>, vector<32x160xf32>,
    %c0_4 = arith.constant 0 : index
    %c0_5 = arith.constant 0 : index
    %4 = vector.load %arg1[%c0_4, %c0_5] : memref<32x4xf32, #tpu.memory_space<vmem>>, vector<32x4xf32>
    %5 = vector.extract_strided_slice %4 {offsets = [0, 0], sizes = [14, 4], strides = [1, 1]} : vector<32x4xf32> to vector<14x4xf32>
    %c2 = arith.constant 2 : index
    %c0_6 = arith.constant 0 : index
    %6 = vector.load %arg16[%c2, %c0_6] : memref<32x20xf32, #tpu.memory_space<vmem>>, vector<14x4xf32>
    tpu.vector_store %arg16[%c2, %c0_6], %5 {strides = array<i32>} : memref<32x20xf32, #tpu.memory_space<vmem>>, vector<14x4xf32>,
    %7 = vector.extract_strided_slice %4 {offsets = [0, 0], sizes = [15, 4], strides = [1, 1]} : vector<32x4xf32> to vector<15x4xf32>
    %c1 = arith.constant 1 : index
    %c4 = arith.constant 4 : index
    %8 = vector.load %arg16[%c1, %c4] : memref<32x20xf32, #tpu.memory_space<vmem>>, vector<15x4xf32>
    tpu.vector_store %arg16[%c1, %c4], %7 {strides = array<i32>} : memref<32x20xf32, #tpu.memory_space<vmem>>, vector<15x4xf32>,
    %9 = vector.extract_strided_slice %4 {offsets = [0, 0], sizes = [16, 4], strides = [1, 1]} : vector<32x4xf32> to vector<16x4xf32>
    %c0_7 = arith.constant 0 : index
    %c8 = arith.constant 8 : index
    %10 = vector.load %arg16[%c0_7, %c8] : memref<32x20xf32, #tpu.memory_space<vmem>>, vector<16x4xf32>
    tpu.vector_store %arg16[%c0_7, %c8], %9 {strides = array<i32>} : memref<32x20xf32, #tpu.memory_space<vmem>>, vector<16x4xf32>,
    %11 = vector.extract_strided_slice %4 {offsets = [1, 0], sizes = [15, 4], strides = [1, 1]} : vector<32x4xf32> to vector<15x4xf32>
    %c0_8 = arith.constant 0 : index
    %c12 = arith.constant 12 : index
    %12 = vector.load %arg16[%c0_8, %c12] : memref<32x20xf32, #tpu.memory_space<vmem>>, vector<15x4xf32>
    tpu.vector_store %arg16[%c0_8, %c12], %11 {strides = array<i32>} : memref<32x20xf32, #tpu.memory_space<vmem>>, vector<15x4xf32>,
    %13 = vector.extract_strided_slice %4 {offsets = [2, 0], sizes = [14, 4], strides = [1, 1]} : vector<32x4xf32> to vector<14x4xf32>
    %c0_9 = arith.constant 0 : index
    %c16 = arith.constant 16 : index
    %14 = vector.load %arg16[%c0_9, %c16] : memref<32x20xf32, #tpu.memory_space<vmem>>, vector<14x4xf32>
    tpu.vector_store %arg16[%c0_9, %c16], %13 {strides = array<i32>} : memref<32x20xf32, #tpu.memory_space<vmem>>, vector<14x4xf32>,
    %15 = vector.extract_strided_slice %4 {offsets = [16, 0], sizes = [14, 4], strides = [1, 1]} : vector<32x4xf32> to vector<14x4xf32>
    %c18 = arith.constant 18 : index
    %c0_10 = arith.constant 0 : index
    %16 = vector.load %arg16[%c18, %c0_10] : memref<32x20xf32, #tpu.memory_space<vmem>>, vector<14x4xf32>
    tpu.vector_store %arg16[%c18, %c0_10], %15 {strides = array<i32>} : memref<32x20xf32, #tpu.memory_space<vmem>>, vector<14x4xf32>,
    %17 = vector.extract_strided_slice %4 {offsets = [16, 0], sizes = [15, 4], strides = [1, 1]} : vector<32x4xf32> to vector<15x4xf32>
    %c17 = arith.constant 17 : index
    %c4_11 = arith.constant 4 : index
    %18 = vector.load %arg16[%c17, %c4_11] : memref<32x20xf32, #tpu.memory_space<vmem>>, vector<15x4xf32>
    tpu.vector_store %arg16[%c17, %c4_11], %17 {strides = array<i32>} : memref<32x20xf32, #tpu.memory_space<vmem>>, vector<15x4xf32>,
    %19 = vector.extract_strided_slice %4 {offsets = [16, 0], sizes = [16, 4], strides = [1, 1]} : vector<32x4xf32> to vector<16x4xf32>
    %c16_12 = arith.constant 16 : index
    %c8_13 = arith.constant 8 : index
    %20 = vector.load %arg16[%c16_12, %c8_13] : memref<32x20xf32, #tpu.memory_space<vmem>>, vector<16x4xf32>
    tpu.vector_store %arg16[%c16_12, %c8_13], %19 {strides = array<i32>} : memref<32x20xf32, #tpu.memory_space<vmem>>, vector<16x4xf32>,
    %21 = vector.extract_strided_slice %4 {offsets = [17, 0], sizes = [15, 4], strides = [1, 1]} : vector<32x4xf32> to vector<15x4xf32>
    %c16_14 = arith.constant 16 : index
    %c12_15 = arith.constant 12 : index
    %22 = vector.load %arg16[%c16_14, %c12_15] : memref<32x20xf32, #tpu.memory_space<vmem>>, vector<15x4xf32>
    tpu.vector_store %arg16[%c16_14, %c12_15], %21 {strides = array<i32>} : memref<32x20xf32, #tpu.memory_space<vmem>>, vector<15x4xf32>,
    %23 = vector.extract_strided_slice %4 {offsets = [18, 0], sizes = [14, 4], strides = [1, 1]} : vector<32x4xf32> to vector<14x4xf32>
    %c16_16 = arith.constant 16 : index
    %c16_17 = arith.constant 16 : index
    %24 = vector.load %arg16[%c16_16, %c16_17] : memref<32x20xf32, #tpu.memory_space<vmem>>, vector<14x4xf32>
    tpu.vector_store %arg16[%c16_16, %c16_17], %23 {strides = array<i32>} : memref<32x20xf32, #tpu.memory_space<vmem>>, vector<14x4xf32>,
    %c0_18 = arith.constant 0 : index
    %c0_19 = arith.constant 0 : index
    %25 = vector.load %arg16[%c0_18, %c0_19] : memref<32x20xf32, #tpu.memory_space<vmem>>, vector<32x20xf32>
    %c0_20 = arith.constant 0 : index
    %c0_21 = arith.constant 0 : index
    %26 = vector.load %arg2[%c0_20, %c0_21] : memref<20x32xf32, #tpu.memory_space<vmem>>, vector<20x32xf32>
    %cst_22 = arith.constant dense<0.000000e+00> : vector<32x32xf32>
    %27 = tpu.matmul %25, %26, %cst_22 {dimension_numbers = #tpu.dot_dimension_numbers<[1], [0], [0], [1], [0, 0, 1, 1], [], []>} : vector<32x20xf32>, vector<20x32xf32>, vector<32x32xf32> -> vector<32x32xf32>
    %c0_23 = arith.constant 0 : index
    %c0_24 = arith.constant 0 : index
    %28 = vector.load %arg3[%c0_23, %c0_24] : memref<1x32xf32, #tpu.memory_space<vmem>>, vector<1x32xf32>
    %29 = vector.broadcast %28 : vector<1x32xf32> to vector<32x32xf32>
    %30 = arith.mulf %27, %29 : vector<32x32xf32>
    %c0_25 = arith.constant 0 : index
    %c0_26 = arith.constant 0 : index
    %31 = vector.load %arg4[%c0_25, %c0_26] : memref<1x32xf32, #tpu.memory_space<vmem>>, vector<1x32xf32>
    %32 = vector.broadcast %31 : vector<1x32xf32> to vector<32x32xf32>
    %33 = arith.addf %30, %32 : vector<32x32xf32>
    %cst_27 = arith.constant 0.000000e+00 : f32
    %34 = vector.broadcast %cst_27 : f32 to vector<32x32xf32>
    %35 = arith.maximumf %33, %34 : vector<32x32xf32>
    %36 = vector.extract_strided_slice %35 {offsets = [0, 0], sizes = [14, 32], strides = [1, 1]} : vector<32x32xf32> to vector<14x32xf32>
    %c2_28 = arith.constant 2 : index
    %c0_29 = arith.constant 0 : index
    %37 = vector.load %arg17[%c2_28, %c0_29] : memref<32x160xf32, #tpu.memory_space<vmem>>, vector<14x32xf32>
    tpu.vector_store %arg17[%c2_28, %c0_29], %36 {strides = array<i32>} : memref<32x160xf32, #tpu.memory_space<vmem>>, vector<14x32xf32>,
    %38 = vector.extract_strided_slice %35 {offsets = [0, 0], sizes = [15, 32], strides = [1, 1]} : vector<32x32xf32> to vector<15x32xf32>
    %c1_30 = arith.constant 1 : index
    %c32 = arith.constant 32 : index
    %39 = vector.load %arg17[%c1_30, %c32] : memref<32x160xf32, #tpu.memory_space<vmem>>, vector<15x32xf32>
    tpu.vector_store %arg17[%c1_30, %c32], %38 {strides = array<i32>} : memref<32x160xf32, #tpu.memory_space<vmem>>, vector<15x32xf32>,
    %40 = vector.extract_strided_slice %35 {offsets = [0, 0], sizes = [16, 32], strides = [1, 1]} : vector<32x32xf32> to vector<16x32xf32>
    %c0_31 = arith.constant 0 : index
    %c64 = arith.constant 64 : index
    %41 = vector.load %arg17[%c0_31, %c64] : memref<32x160xf32, #tpu.memory_space<vmem>>, vector<16x32xf32>
    tpu.vector_store %arg17[%c0_31, %c64], %40 {strides = array<i32>} : memref<32x160xf32, #tpu.memory_space<vmem>>, vector<16x32xf32>,
    %42 = vector.extract_strided_slice %35 {offsets = [1, 0], sizes = [15, 32], strides = [1, 1]} : vector<32x32xf32> to vector<15x32xf32>
    %c0_32 = arith.constant 0 : index
    %c96 = arith.constant 96 : index
    %43 = vector.load %arg17[%c0_32, %c96] : memref<32x160xf32, #tpu.memory_space<vmem>>, vector<15x32xf32>
    tpu.vector_store %arg17[%c0_32, %c96], %42 {strides = array<i32>} : memref<32x160xf32, #tpu.memory_space<vmem>>, vector<15x32xf32>,
    %44 = vector.extract_strided_slice %35 {offsets = [2, 0], sizes = [14, 32], strides = [1, 1]} : vector<32x32xf32> to vector<14x32xf32>
    %c0_33 = arith.constant 0 : index
    %c128 = arith.constant 128 : index
    %45 = vector.load %arg17[%c0_33, %c128] : memref<32x160xf32, #tpu.memory_space<vmem>>, vector<14x32xf32>
    tpu.vector_store %arg17[%c0_33, %c128], %44 {strides = array<i32>} : memref<32x160xf32, #tpu.memory_space<vmem>>, vector<14x32xf32>,
    %46 = vector.extract_strided_slice %35 {offsets = [16, 0], sizes = [14, 32], strides = [1, 1]} : vector<32x32xf32> to vector<14x32xf32>
    %c18_34 = arith.constant 18 : index
    %c0_35 = arith.constant 0 : index
    %47 = vector.load %arg17[%c18_34, %c0_35] : memref<32x160xf32, #tpu.memory_space<vmem>>, vector<14x32xf32>
    tpu.vector_store %arg17[%c18_34, %c0_35], %46 {strides = array<i32>} : memref<32x160xf32, #tpu.memory_space<vmem>>, vector<14x32xf32>,
    %48 = vector.extract_strided_slice %35 {offsets = [16, 0], sizes = [15, 32], strides = [1, 1]} : vector<32x32xf32> to vector<15x32xf32>
    %c17_36 = arith.constant 17 : index
    %c32_37 = arith.constant 32 : index
    %49 = vector.load %arg17[%c17_36, %c32_37] : memref<32x160xf32, #tpu.memory_space<vmem>>, vector<15x32xf32>
    tpu.vector_store %arg17[%c17_36, %c32_37], %48 {strides = array<i32>} : memref<32x160xf32, #tpu.memory_space<vmem>>, vector<15x32xf32>,
    %50 = vector.extract_strided_slice %35 {offsets = [16, 0], sizes = [16, 32], strides = [1, 1]} : vector<32x32xf32> to vector<16x32xf32>
    %c16_38 = arith.constant 16 : index
    %c64_39 = arith.constant 64 : index
    %51 = vector.load %arg17[%c16_38, %c64_39] : memref<32x160xf32, #tpu.memory_space<vmem>>, vector<16x32xf32>
    tpu.vector_store %arg17[%c16_38, %c64_39], %50 {strides = array<i32>} : memref<32x160xf32, #tpu.memory_space<vmem>>, vector<16x32xf32>,
    %52 = vector.extract_strided_slice %35 {offsets = [17, 0], sizes = [15, 32], strides = [1, 1]} : vector<32x32xf32> to vector<15x32xf32>
    %c16_40 = arith.constant 16 : index
    %c96_41 = arith.constant 96 : index
    %53 = vector.load %arg17[%c16_40, %c96_41] : memref<32x160xf32, #tpu.memory_space<vmem>>, vector<15x32xf32>
    tpu.vector_store %arg17[%c16_40, %c96_41], %52 {strides = array<i32>} : memref<32x160xf32, #tpu.memory_space<vmem>>, vector<15x32xf32>,
    %54 = vector.extract_strided_slice %35 {offsets = [18, 0], sizes = [14, 32], strides = [1, 1]} : vector<32x32xf32> to vector<14x32xf32>
    %c16_42 = arith.constant 16 : index
    %c128_43 = arith.constant 128 : index
    %55 = vector.load %arg17[%c16_42, %c128_43] : memref<32x160xf32, #tpu.memory_space<vmem>>, vector<14x32xf32>
    tpu.vector_store %arg17[%c16_42, %c128_43], %54 {strides = array<i32>} : memref<32x160xf32, #tpu.memory_space<vmem>>, vector<14x32xf32>,
    %c0_44 = arith.constant 0 : index
    %c0_45 = arith.constant 0 : index
    %56 = vector.load %arg17[%c0_44, %c0_45] : memref<32x160xf32, #tpu.memory_space<vmem>>, vector<32x160xf32>
    %c0_46 = arith.constant 0 : index
    %c0_47 = arith.constant 0 : index
    %57 = vector.load %arg5[%c0_46, %c0_47] : memref<160x32xf32, #tpu.memory_space<vmem>>, vector<160x32xf32>
    %cst_48 = arith.constant dense<0.000000e+00> : vector<32x32xf32>
    %58 = tpu.matmul %56, %57, %cst_48 {dimension_numbers = #tpu.dot_dimension_numbers<[1], [0], [0], [1], [0, 0, 1, 1], [], []>} : vector<32x160xf32>, vector<160x32xf32>, vector<32x32xf32> -> vector<32x32xf32>
    %c0_49 = arith.constant 0 : index
    %c0_50 = arith.constant 0 : index
    %59 = vector.load %arg6[%c0_49, %c0_50] : memref<1x32xf32, #tpu.memory_space<vmem>>, vector<1x32xf32>
    %60 = vector.broadcast %59 : vector<1x32xf32> to vector<32x32xf32>
    %61 = arith.mulf %58, %60 : vector<32x32xf32>
    %c0_51 = arith.constant 0 : index
    %c0_52 = arith.constant 0 : index
    %62 = vector.load %arg7[%c0_51, %c0_52] : memref<1x32xf32, #tpu.memory_space<vmem>>, vector<1x32xf32>
    %63 = vector.broadcast %62 : vector<1x32xf32> to vector<32x32xf32>
    %64 = arith.addf %61, %63 : vector<32x32xf32>
    %cst_53 = arith.constant 0.000000e+00 : f32
    %65 = vector.broadcast %cst_53 : f32 to vector<32x32xf32>
    %66 = arith.maximumf %64, %65 : vector<32x32xf32>
    %67 = vector.extract_strided_slice %66 {offsets = [0, 0], sizes = [14, 32], strides = [1, 1]} : vector<32x32xf32> to vector<14x32xf32>
    %c2_54 = arith.constant 2 : index
    %c0_55 = arith.constant 0 : index
    %68 = vector.load %arg17[%c2_54, %c0_55] : memref<32x160xf32, #tpu.memory_space<vmem>>, vector<14x32xf32>
    tpu.vector_store %arg17[%c2_54, %c0_55], %67 {strides = array<i32>} : memref<32x160xf32, #tpu.memory_space<vmem>>, vector<14x32xf32>,
    %69 = vector.extract_strided_slice %66 {offsets = [0, 0], sizes = [15, 32], strides = [1, 1]} : vector<32x32xf32> to vector<15x32xf32>
    %c1_56 = arith.constant 1 : index
    %c32_57 = arith.constant 32 : index
    %70 = vector.load %arg17[%c1_56, %c32_57] : memref<32x160xf32, #tpu.memory_space<vmem>>, vector<15x32xf32>
    tpu.vector_store %arg17[%c1_56, %c32_57], %69 {strides = array<i32>} : memref<32x160xf32, #tpu.memory_space<vmem>>, vector<15x32xf32>,
    %71 = vector.extract_strided_slice %66 {offsets = [0, 0], sizes = [16, 32], strides = [1, 1]} : vector<32x32xf32> to vector<16x32xf32>
    %c0_58 = arith.constant 0 : index
    %c64_59 = arith.constant 64 : index
    %72 = vector.load %arg17[%c0_58, %c64_59] : memref<32x160xf32, #tpu.memory_space<vmem>>, vector<16x32xf32>
    tpu.vector_store %arg17[%c0_58, %c64_59], %71 {strides = array<i32>} : memref<32x160xf32, #tpu.memory_space<vmem>>, vector<16x32xf32>,
    %73 = vector.extract_strided_slice %66 {offsets = [1, 0], sizes = [15, 32], strides = [1, 1]} : vector<32x32xf32> to vector<15x32xf32>
    %c0_60 = arith.constant 0 : index
    %c96_61 = arith.constant 96 : index
    %74 = vector.load %arg17[%c0_60, %c96_61] : memref<32x160xf32, #tpu.memory_space<vmem>>, vector<15x32xf32>
    tpu.vector_store %arg17[%c0_60, %c96_61], %73 {strides = array<i32>} : memref<32x160xf32, #tpu.memory_space<vmem>>, vector<15x32xf32>,
    %75 = vector.extract_strided_slice %66 {offsets = [2, 0], sizes = [14, 32], strides = [1, 1]} : vector<32x32xf32> to vector<14x32xf32>
    %c0_62 = arith.constant 0 : index
    %c128_63 = arith.constant 128 : index
    %76 = vector.load %arg17[%c0_62, %c128_63] : memref<32x160xf32, #tpu.memory_space<vmem>>, vector<14x32xf32>
    tpu.vector_store %arg17[%c0_62, %c128_63], %75 {strides = array<i32>} : memref<32x160xf32, #tpu.memory_space<vmem>>, vector<14x32xf32>,
    %77 = vector.extract_strided_slice %66 {offsets = [16, 0], sizes = [14, 32], strides = [1, 1]} : vector<32x32xf32> to vector<14x32xf32>
    %c18_64 = arith.constant 18 : index
    %c0_65 = arith.constant 0 : index
    %78 = vector.load %arg17[%c18_64, %c0_65] : memref<32x160xf32, #tpu.memory_space<vmem>>, vector<14x32xf32>
    tpu.vector_store %arg17[%c18_64, %c0_65], %77 {strides = array<i32>} : memref<32x160xf32, #tpu.memory_space<vmem>>, vector<14x32xf32>,
    %79 = vector.extract_strided_slice %66 {offsets = [16, 0], sizes = [15, 32], strides = [1, 1]} : vector<32x32xf32> to vector<15x32xf32>
    %c17_66 = arith.constant 17 : index
    %c32_67 = arith.constant 32 : index
    %80 = vector.load %arg17[%c17_66, %c32_67] : memref<32x160xf32, #tpu.memory_space<vmem>>, vector<15x32xf32>
    tpu.vector_store %arg17[%c17_66, %c32_67], %79 {strides = array<i32>} : memref<32x160xf32, #tpu.memory_space<vmem>>, vector<15x32xf32>,
    %81 = vector.extract_strided_slice %66 {offsets = [16, 0], sizes = [16, 32], strides = [1, 1]} : vector<32x32xf32> to vector<16x32xf32>
    %c16_68 = arith.constant 16 : index
    %c64_69 = arith.constant 64 : index
    %82 = vector.load %arg17[%c16_68, %c64_69] : memref<32x160xf32, #tpu.memory_space<vmem>>, vector<16x32xf32>
    tpu.vector_store %arg17[%c16_68, %c64_69], %81 {strides = array<i32>} : memref<32x160xf32, #tpu.memory_space<vmem>>, vector<16x32xf32>,
    %83 = vector.extract_strided_slice %66 {offsets = [17, 0], sizes = [15, 32], strides = [1, 1]} : vector<32x32xf32> to vector<15x32xf32>
    %c16_70 = arith.constant 16 : index
    %c96_71 = arith.constant 96 : index
    %84 = vector.load %arg17[%c16_70, %c96_71] : memref<32x160xf32, #tpu.memory_space<vmem>>, vector<15x32xf32>
    tpu.vector_store %arg17[%c16_70, %c96_71], %83 {strides = array<i32>} : memref<32x160xf32, #tpu.memory_space<vmem>>, vector<15x32xf32>,
    %85 = vector.extract_strided_slice %66 {offsets = [18, 0], sizes = [14, 32], strides = [1, 1]} : vector<32x32xf32> to vector<14x32xf32>
    %c16_72 = arith.constant 16 : index
    %c128_73 = arith.constant 128 : index
    %86 = vector.load %arg17[%c16_72, %c128_73] : memref<32x160xf32, #tpu.memory_space<vmem>>, vector<14x32xf32>
    tpu.vector_store %arg17[%c16_72, %c128_73], %85 {strides = array<i32>} : memref<32x160xf32, #tpu.memory_space<vmem>>, vector<14x32xf32>,
    %c0_74 = arith.constant 0 : index
    %c0_75 = arith.constant 0 : index
    %87 = vector.load %arg17[%c0_74, %c0_75] : memref<32x160xf32, #tpu.memory_space<vmem>>, vector<32x160xf32>
    %c0_76 = arith.constant 0 : index
    %c0_77 = arith.constant 0 : index
    %88 = vector.load %arg8[%c0_76, %c0_77] : memref<160x32xf32, #tpu.memory_space<vmem>>, vector<160x32xf32>
    %cst_78 = arith.constant dense<0.000000e+00> : vector<32x32xf32>
    %89 = tpu.matmul %87, %88, %cst_78 {dimension_numbers = #tpu.dot_dimension_numbers<[1], [0], [0], [1], [0, 0, 1, 1], [], []>} : vector<32x160xf32>, vector<160x32xf32>, vector<32x32xf32> -> vector<32x32xf32>
    %c0_79 = arith.constant 0 : index
    %c0_80 = arith.constant 0 : index
    %90 = vector.load %arg9[%c0_79, %c0_80] : memref<1x32xf32, #tpu.memory_space<vmem>>, vector<1x32xf32>
    %91 = vector.broadcast %90 : vector<1x32xf32> to vector<32x32xf32>
    %92 = arith.mulf %89, %91 : vector<32x32xf32>
    %c0_81 = arith.constant 0 : index
    %c0_82 = arith.constant 0 : index
    %93 = vector.load %arg10[%c0_81, %c0_82] : memref<1x32xf32, #tpu.memory_space<vmem>>, vector<1x32xf32>
    %94 = vector.broadcast %93 : vector<1x32xf32> to vector<32x32xf32>
    %95 = arith.addf %92, %94 : vector<32x32xf32>
    %cst_83 = arith.constant 0.000000e+00 : f32
    %96 = vector.broadcast %cst_83 : f32 to vector<32x32xf32>
    %97 = arith.maximumf %95, %96 : vector<32x32xf32>
    %98 = vector.extract_strided_slice %97 {offsets = [0, 0], sizes = [1, 32], strides = [1, 1]} : vector<32x32xf32> to vector<1x32xf32>
    %c0_84 = arith.constant 0 : index
    %c0_85 = arith.constant 0 : index
    %99 = vector.load %arg18[%c0_84, %c0_85] : memref<2x512xf32, #tpu.memory_space<vmem>>, vector<1x32xf32>
    tpu.vector_store %arg18[%c0_84, %c0_85], %98 {strides = array<i32>} : memref<2x512xf32, #tpu.memory_space<vmem>>, vector<1x32xf32>,
    %100 = vector.extract_strided_slice %97 {offsets = [1, 0], sizes = [1, 32], strides = [1, 1]} : vector<32x32xf32> to vector<1x32xf32>
    %c0_86 = arith.constant 0 : index
    %c32_87 = arith.constant 32 : index
    %101 = vector.load %arg18[%c0_86, %c32_87] : memref<2x512xf32, #tpu.memory_space<vmem>>, vector<1x32xf32>
    tpu.vector_store %arg18[%c0_86, %c32_87], %100 {strides = array<i32>} : memref<2x512xf32, #tpu.memory_space<vmem>>, vector<1x32xf32>,
    %102 = vector.extract_strided_slice %97 {offsets = [2, 0], sizes = [1, 32], strides = [1, 1]} : vector<32x32xf32> to vector<1x32xf32>
    %c0_88 = arith.constant 0 : index
    %c64_89 = arith.constant 64 : index
    %103 = vector.load %arg18[%c0_88, %c64_89] : memref<2x512xf32, #tpu.memory_space<vmem>>, vector<1x32xf32>
    tpu.vector_store %arg18[%c0_88, %c64_89], %102 {strides = array<i32>} : memref<2x512xf32, #tpu.memory_space<vmem>>, vector<1x32xf32>,
    %104 = vector.extract_strided_slice %97 {offsets = [3, 0], sizes = [1, 32], strides = [1, 1]} : vector<32x32xf32> to vector<1x32xf32>
    %c0_90 = arith.constant 0 : index
    %c96_91 = arith.constant 96 : index
    %105 = vector.load %arg18[%c0_90, %c96_91] : memref<2x512xf32, #tpu.memory_space<vmem>>, vector<1x32xf32>
    tpu.vector_store %arg18[%c0_90, %c96_91], %104 {strides = array<i32>} : memref<2x512xf32, #tpu.memory_space<vmem>>, vector<1x32xf32>,
    %106 = vector.extract_strided_slice %97 {offsets = [4, 0], sizes = [1, 32], strides = [1, 1]} : vector<32x32xf32> to vector<1x32xf32>
    %c0_92 = arith.constant 0 : index
    %c128_93 = arith.constant 128 : index
    %107 = vector.load %arg18[%c0_92, %c128_93] : memref<2x512xf32, #tpu.memory_space<vmem>>, vector<1x32xf32>
    tpu.vector_store %arg18[%c0_92, %c128_93], %106 {strides = array<i32>} : memref<2x512xf32, #tpu.memory_space<vmem>>, vector<1x32xf32>,
    %108 = vector.extract_strided_slice %97 {offsets = [5, 0], sizes = [1, 32], strides = [1, 1]} : vector<32x32xf32> to vector<1x32xf32>
    %c0_94 = arith.constant 0 : index
    %c160 = arith.constant 160 : index
    %109 = vector.load %arg18[%c0_94, %c160] : memref<2x512xf32, #tpu.memory_space<vmem>>, vector<1x32xf32>
    tpu.vector_store %arg18[%c0_94, %c160], %108 {strides = array<i32>} : memref<2x512xf32, #tpu.memory_space<vmem>>, vector<1x32xf32>,
    %110 = vector.extract_strided_slice %97 {offsets = [6, 0], sizes = [1, 32], strides = [1, 1]} : vector<32x32xf32> to vector<1x32xf32>
    %c0_95 = arith.constant 0 : index
    %c192 = arith.constant 192 : index
    %111 = vector.load %arg18[%c0_95, %c192] : memref<2x512xf32, #tpu.memory_space<vmem>>, vector<1x32xf32>
    tpu.vector_store %arg18[%c0_95, %c192], %110 {strides = array<i32>} : memref<2x512xf32, #tpu.memory_space<vmem>>, vector<1x32xf32>,
    %112 = vector.extract_strided_slice %97 {offsets = [7, 0], sizes = [1, 32], strides = [1, 1]} : vector<32x32xf32> to vector<1x32xf32>
    %c0_96 = arith.constant 0 : index
    %c224 = arith.constant 224 : index
    %113 = vector.load %arg18[%c0_96, %c224] : memref<2x512xf32, #tpu.memory_space<vmem>>, vector<1x32xf32>
    tpu.vector_store %arg18[%c0_96, %c224], %112 {strides = array<i32>} : memref<2x512xf32, #tpu.memory_space<vmem>>, vector<1x32xf32>,
    %114 = vector.extract_strided_slice %97 {offsets = [8, 0], sizes = [1, 32], strides = [1, 1]} : vector<32x32xf32> to vector<1x32xf32>
    %c0_97 = arith.constant 0 : index
    %c256 = arith.constant 256 : index
    %115 = vector.load %arg18[%c0_97, %c256] : memref<2x512xf32, #tpu.memory_space<vmem>>, vector<1x32xf32>
    tpu.vector_store %arg18[%c0_97, %c256], %114 {strides = array<i32>} : memref<2x512xf32, #tpu.memory_space<vmem>>, vector<1x32xf32>,
    %116 = vector.extract_strided_slice %97 {offsets = [9, 0], sizes = [1, 32], strides = [1, 1]} : vector<32x32xf32> to vector<1x32xf32>
    %c0_98 = arith.constant 0 : index
    %c288 = arith.constant 288 : index
    %117 = vector.load %arg18[%c0_98, %c288] : memref<2x512xf32, #tpu.memory_space<vmem>>, vector<1x32xf32>
    tpu.vector_store %arg18[%c0_98, %c288], %116 {strides = array<i32>} : memref<2x512xf32, #tpu.memory_space<vmem>>, vector<1x32xf32>,
    %118 = vector.extract_strided_slice %97 {offsets = [10, 0], sizes = [1, 32], strides = [1, 1]} : vector<32x32xf32> to vector<1x32xf32>
    %c0_99 = arith.constant 0 : index
    %c320 = arith.constant 320 : index
    %119 = vector.load %arg18[%c0_99, %c320] : memref<2x512xf32, #tpu.memory_space<vmem>>, vector<1x32xf32>
    tpu.vector_store %arg18[%c0_99, %c320], %118 {strides = array<i32>} : memref<2x512xf32, #tpu.memory_space<vmem>>, vector<1x32xf32>,
    %120 = vector.extract_strided_slice %97 {offsets = [11, 0], sizes = [1, 32], strides = [1, 1]} : vector<32x32xf32> to vector<1x32xf32>
    %c0_100 = arith.constant 0 : index
    %c352 = arith.constant 352 : index
    %121 = vector.load %arg18[%c0_100, %c352] : memref<2x512xf32, #tpu.memory_space<vmem>>, vector<1x32xf32>
    tpu.vector_store %arg18[%c0_100, %c352], %120 {strides = array<i32>} : memref<2x512xf32, #tpu.memory_space<vmem>>, vector<1x32xf32>,
    %122 = vector.extract_strided_slice %97 {offsets = [12, 0], sizes = [1, 32], strides = [1, 1]} : vector<32x32xf32> to vector<1x32xf32>
    %c0_101 = arith.constant 0 : index
    %c384 = arith.constant 384 : index
    %123 = vector.load %arg18[%c0_101, %c384] : memref<2x512xf32, #tpu.memory_space<vmem>>, vector<1x32xf32>
    tpu.vector_store %arg18[%c0_101, %c384], %122 {strides = array<i32>} : memref<2x512xf32, #tpu.memory_space<vmem>>, vector<1x32xf32>,
    %124 = vector.extract_strided_slice %97 {offsets = [13, 0], sizes = [1, 32], strides = [1, 1]} : vector<32x32xf32> to vector<1x32xf32>
    %c0_102 = arith.constant 0 : index
    %c416 = arith.constant 416 : index
    %125 = vector.load %arg18[%c0_102, %c416] : memref<2x512xf32, #tpu.memory_space<vmem>>, vector<1x32xf32>
    tpu.vector_store %arg18[%c0_102, %c416], %124 {strides = array<i32>} : memref<2x512xf32, #tpu.memory_space<vmem>>, vector<1x32xf32>,
    %126 = vector.extract_strided_slice %97 {offsets = [14, 0], sizes = [1, 32], strides = [1, 1]} : vector<32x32xf32> to vector<1x32xf32>
    %c0_103 = arith.constant 0 : index
    %c448 = arith.constant 448 : index
    %127 = vector.load %arg18[%c0_103, %c448] : memref<2x512xf32, #tpu.memory_space<vmem>>, vector<1x32xf32>
    tpu.vector_store %arg18[%c0_103, %c448], %126 {strides = array<i32>} : memref<2x512xf32, #tpu.memory_space<vmem>>, vector<1x32xf32>,
    %128 = vector.extract_strided_slice %97 {offsets = [15, 0], sizes = [1, 32], strides = [1, 1]} : vector<32x32xf32> to vector<1x32xf32>
    %c0_104 = arith.constant 0 : index
    %c480 = arith.constant 480 : index
    %129 = vector.load %arg18[%c0_104, %c480] : memref<2x512xf32, #tpu.memory_space<vmem>>, vector<1x32xf32>
    tpu.vector_store %arg18[%c0_104, %c480], %128 {strides = array<i32>} : memref<2x512xf32, #tpu.memory_space<vmem>>, vector<1x32xf32>,
    %130 = vector.extract_strided_slice %97 {offsets = [16, 0], sizes = [1, 32], strides = [1, 1]} : vector<32x32xf32> to vector<1x32xf32>
    %c1_105 = arith.constant 1 : index
    %c0_106 = arith.constant 0 : index
    %131 = vector.load %arg18[%c1_105, %c0_106] : memref<2x512xf32, #tpu.memory_space<vmem>>, vector<1x32xf32>
    tpu.vector_store %arg18[%c1_105, %c0_106], %130 {strides = array<i32>} : memref<2x512xf32, #tpu.memory_space<vmem>>, vector<1x32xf32>,
    %132 = vector.extract_strided_slice %97 {offsets = [17, 0], sizes = [1, 32], strides = [1, 1]} : vector<32x32xf32> to vector<1x32xf32>
    %c1_107 = arith.constant 1 : index
    %c32_108 = arith.constant 32 : index
    %133 = vector.load %arg18[%c1_107, %c32_108] : memref<2x512xf32, #tpu.memory_space<vmem>>, vector<1x32xf32>
    tpu.vector_store %arg18[%c1_107, %c32_108], %132 {strides = array<i32>} : memref<2x512xf32, #tpu.memory_space<vmem>>, vector<1x32xf32>,
    %134 = vector.extract_strided_slice %97 {offsets = [18, 0], sizes = [1, 32], strides = [1, 1]} : vector<32x32xf32> to vector<1x32xf32>
    %c1_109 = arith.constant 1 : index
    %c64_110 = arith.constant 64 : index
    %135 = vector.load %arg18[%c1_109, %c64_110] : memref<2x512xf32, #tpu.memory_space<vmem>>, vector<1x32xf32>
    tpu.vector_store %arg18[%c1_109, %c64_110], %134 {strides = array<i32>} : memref<2x512xf32, #tpu.memory_space<vmem>>, vector<1x32xf32>,
    %136 = vector.extract_strided_slice %97 {offsets = [19, 0], sizes = [1, 32], strides = [1, 1]} : vector<32x32xf32> to vector<1x32xf32>
    %c1_111 = arith.constant 1 : index
    %c96_112 = arith.constant 96 : index
    %137 = vector.load %arg18[%c1_111, %c96_112] : memref<2x512xf32, #tpu.memory_space<vmem>>, vector<1x32xf32>
    tpu.vector_store %arg18[%c1_111, %c96_112], %136 {strides = array<i32>} : memref<2x512xf32, #tpu.memory_space<vmem>>, vector<1x32xf32>,
    %138 = vector.extract_strided_slice %97 {offsets = [20, 0], sizes = [1, 32], strides = [1, 1]} : vector<32x32xf32> to vector<1x32xf32>
    %c1_113 = arith.constant 1 : index
    %c128_114 = arith.constant 128 : index
    %139 = vector.load %arg18[%c1_113, %c128_114] : memref<2x512xf32, #tpu.memory_space<vmem>>, vector<1x32xf32>
    tpu.vector_store %arg18[%c1_113, %c128_114], %138 {strides = array<i32>} : memref<2x512xf32, #tpu.memory_space<vmem>>, vector<1x32xf32>,
    %140 = vector.extract_strided_slice %97 {offsets = [21, 0], sizes = [1, 32], strides = [1, 1]} : vector<32x32xf32> to vector<1x32xf32>
    %c1_115 = arith.constant 1 : index
    %c160_116 = arith.constant 160 : index
    %141 = vector.load %arg18[%c1_115, %c160_116] : memref<2x512xf32, #tpu.memory_space<vmem>>, vector<1x32xf32>
    tpu.vector_store %arg18[%c1_115, %c160_116], %140 {strides = array<i32>} : memref<2x512xf32, #tpu.memory_space<vmem>>, vector<1x32xf32>,
    %142 = vector.extract_strided_slice %97 {offsets = [22, 0], sizes = [1, 32], strides = [1, 1]} : vector<32x32xf32> to vector<1x32xf32>
    %c1_117 = arith.constant 1 : index
    %c192_118 = arith.constant 192 : index
    %143 = vector.load %arg18[%c1_117, %c192_118] : memref<2x512xf32, #tpu.memory_space<vmem>>, vector<1x32xf32>
    tpu.vector_store %arg18[%c1_117, %c192_118], %142 {strides = array<i32>} : memref<2x512xf32, #tpu.memory_space<vmem>>, vector<1x32xf32>,
    %144 = vector.extract_strided_slice %97 {offsets = [23, 0], sizes = [1, 32], strides = [1, 1]} : vector<32x32xf32> to vector<1x32xf32>
    %c1_119 = arith.constant 1 : index
    %c224_120 = arith.constant 224 : index
    %145 = vector.load %arg18[%c1_119, %c224_120] : memref<2x512xf32, #tpu.memory_space<vmem>>, vector<1x32xf32>
    tpu.vector_store %arg18[%c1_119, %c224_120], %144 {strides = array<i32>} : memref<2x512xf32, #tpu.memory_space<vmem>>, vector<1x32xf32>,
    %146 = vector.extract_strided_slice %97 {offsets = [24, 0], sizes = [1, 32], strides = [1, 1]} : vector<32x32xf32> to vector<1x32xf32>
    %c1_121 = arith.constant 1 : index
    %c256_122 = arith.constant 256 : index
    %147 = vector.load %arg18[%c1_121, %c256_122] : memref<2x512xf32, #tpu.memory_space<vmem>>, vector<1x32xf32>
    tpu.vector_store %arg18[%c1_121, %c256_122], %146 {strides = array<i32>} : memref<2x512xf32, #tpu.memory_space<vmem>>, vector<1x32xf32>,
    %148 = vector.extract_strided_slice %97 {offsets = [25, 0], sizes = [1, 32], strides = [1, 1]} : vector<32x32xf32> to vector<1x32xf32>
    %c1_123 = arith.constant 1 : index
    %c288_124 = arith.constant 288 : index
    %149 = vector.load %arg18[%c1_123, %c288_124] : memref<2x512xf32, #tpu.memory_space<vmem>>, vector<1x32xf32>
    tpu.vector_store %arg18[%c1_123, %c288_124], %148 {strides = array<i32>} : memref<2x512xf32, #tpu.memory_space<vmem>>, vector<1x32xf32>,
    %150 = vector.extract_strided_slice %97 {offsets = [26, 0], sizes = [1, 32], strides = [1, 1]} : vector<32x32xf32> to vector<1x32xf32>
    %c1_125 = arith.constant 1 : index
    %c320_126 = arith.constant 320 : index
    %151 = vector.load %arg18[%c1_125, %c320_126] : memref<2x512xf32, #tpu.memory_space<vmem>>, vector<1x32xf32>
    tpu.vector_store %arg18[%c1_125, %c320_126], %150 {strides = array<i32>} : memref<2x512xf32, #tpu.memory_space<vmem>>, vector<1x32xf32>,
    %152 = vector.extract_strided_slice %97 {offsets = [27, 0], sizes = [1, 32], strides = [1, 1]} : vector<32x32xf32> to vector<1x32xf32>
    %c1_127 = arith.constant 1 : index
    %c352_128 = arith.constant 352 : index
    %153 = vector.load %arg18[%c1_127, %c352_128] : memref<2x512xf32, #tpu.memory_space<vmem>>, vector<1x32xf32>
    tpu.vector_store %arg18[%c1_127, %c352_128], %152 {strides = array<i32>} : memref<2x512xf32, #tpu.memory_space<vmem>>, vector<1x32xf32>,
    %154 = vector.extract_strided_slice %97 {offsets = [28, 0], sizes = [1, 32], strides = [1, 1]} : vector<32x32xf32> to vector<1x32xf32>
    %c1_129 = arith.constant 1 : index
    %c384_130 = arith.constant 384 : index
    %155 = vector.load %arg18[%c1_129, %c384_130] : memref<2x512xf32, #tpu.memory_space<vmem>>, vector<1x32xf32>
    tpu.vector_store %arg18[%c1_129, %c384_130], %154 {strides = array<i32>} : memref<2x512xf32, #tpu.memory_space<vmem>>, vector<1x32xf32>,
    %156 = vector.extract_strided_slice %97 {offsets = [29, 0], sizes = [1, 32], strides = [1, 1]} : vector<32x32xf32> to vector<1x32xf32>
    %c1_131 = arith.constant 1 : index
    %c416_132 = arith.constant 416 : index
    %157 = vector.load %arg18[%c1_131, %c416_132] : memref<2x512xf32, #tpu.memory_space<vmem>>, vector<1x32xf32>
    tpu.vector_store %arg18[%c1_131, %c416_132], %156 {strides = array<i32>} : memref<2x512xf32, #tpu.memory_space<vmem>>, vector<1x32xf32>,
    %158 = vector.extract_strided_slice %97 {offsets = [30, 0], sizes = [1, 32], strides = [1, 1]} : vector<32x32xf32> to vector<1x32xf32>
    %c1_133 = arith.constant 1 : index
    %c448_134 = arith.constant 448 : index
    %159 = vector.load %arg18[%c1_133, %c448_134] : memref<2x512xf32, #tpu.memory_space<vmem>>, vector<1x32xf32>
    tpu.vector_store %arg18[%c1_133, %c448_134], %158 {strides = array<i32>} : memref<2x512xf32, #tpu.memory_space<vmem>>, vector<1x32xf32>,
    %160 = vector.extract_strided_slice %97 {offsets = [31, 0], sizes = [1, 32], strides = [1, 1]} : vector<32x32xf32> to vector<1x32xf32>
    %c1_135 = arith.constant 1 : index
    %c480_136 = arith.constant 480 : index
    %161 = vector.load %arg18[%c1_135, %c480_136] : memref<2x512xf32, #tpu.memory_space<vmem>>, vector<1x32xf32>
    tpu.vector_store %arg18[%c1_135, %c480_136], %160 {strides = array<i32>} : memref<2x512xf32, #tpu.memory_space<vmem>>, vector<1x32xf32>,
    %c0_137 = arith.constant 0 : index
    %c0_138 = arith.constant 0 : index
    %162 = vector.load %arg18[%c0_137, %c0_138] : memref<2x512xf32, #tpu.memory_space<vmem>>, vector<2x512xf32>
    %c0_139 = arith.constant 0 : index
    %c0_140 = arith.constant 0 : index
    %163 = vector.load %arg11[%c0_139, %c0_140] : memref<512x128xf32, #tpu.memory_space<vmem>>, vector<512x128xf32>
    %cst_141 = arith.constant dense<0.000000e+00> : vector<2x128xf32>
    %164 = tpu.matmul %162, %163, %cst_141 {dimension_numbers = #tpu.dot_dimension_numbers<[1], [0], [0], [1], [0, 0, 1, 1], [], []>} : vector<2x512xf32>, vector<512x128xf32>, vector<2x128xf32> -> vector<2x128xf32>
    %c0_142 = arith.constant 0 : index
    %c0_143 = arith.constant 0 : index
    %165 = vector.load %arg12[%c0_142, %c0_143] : memref<1x128xf32, #tpu.memory_space<vmem>>, vector<1x128xf32>
    %166 = vector.broadcast %165 : vector<1x128xf32> to vector<2x128xf32>
    %167 = arith.addf %164, %166 : vector<2x128xf32>
    %cst_144 = arith.constant 0.000000e+00 : f32
    %168 = vector.broadcast %cst_144 : f32 to vector<2x128xf32>
    %169 = arith.maximumf %167, %168 : vector<2x128xf32>
    %c0_145 = arith.constant 0 : index
    %c0_146 = arith.constant 0 : index
    %170 = vector.load %arg13[%c0_145, %c0_146] : memref<128x1xf32, #tpu.memory_space<vmem>>, vector<128x1xf32>
    %cst_147 = arith.constant dense<0.000000e+00> : vector<2x1xf32>
    %171 = tpu.matmul %169, %170, %cst_147 {dimension_numbers = #tpu.dot_dimension_numbers<[1], [0], [0], [1], [0, 0, 1, 1], [], []>} : vector<2x128xf32>, vector<128x1xf32>, vector<2x1xf32> -> vector<2x1xf32>
    %c0_148 = arith.constant 0 : index
    %c0_149 = arith.constant 0 : index
    %172 = vector.load %arg14[%c0_148, %c0_149] : memref<1x1xf32, #tpu.memory_space<vmem>>, vector<1x1xf32>
    %173 = vector.broadcast %172 : vector<1x1xf32> to vector<2x1xf32>
    %174 = arith.addf %171, %173 : vector<2x1xf32>
    %c0_150 = arith.constant 0 : index
    %c0_151 = arith.constant 0 : index
    %175 = vector.load %arg15[%c0_150, %c0_151] : memref<2x1xf32, #tpu.memory_space<vmem>>, vector<2x1xf32>
    tpu.vector_store %arg15[%c0_150, %c0_151], %174 {strides = array<i32>} : memref<2x1xf32, #tpu.memory_space<vmem>>, vector<2x1xf32>,
    return
  }
  func.func @transform_0(%arg0: i32) -> (i32, i32) {
    %c0_i32 = arith.constant 0 : i32
    %c0_i32_0 = arith.constant 0 : i32
    return %arg0, %c0_i32 : i32, i32
  }
  func.func @transform_1(%arg0: i32) -> (i32, i32) {
    %c0_i32 = arith.constant 0 : i32
    %c0_i32_0 = arith.constant 0 : i32
    %c0_i32_1 = arith.constant 0 : i32
    return %c0_i32, %c0_i32_0 : i32, i32
  }
  func.func @transform_2(%arg0: i32) -> (i32, i32) {
    %c0_i32 = arith.constant 0 : i32
    %c0_i32_0 = arith.constant 0 : i32
    %c0_i32_1 = arith.constant 0 : i32
    return %c0_i32, %c0_i32_0 : i32, i32
  }
  func.func @transform_3(%arg0: i32) -> (i32, i32) {
    %c0_i32 = arith.constant 0 : i32
    %c0_i32_0 = arith.constant 0 : i32
    %c0_i32_1 = arith.constant 0 : i32
    return %c0_i32, %c0_i32_0 : i32, i32
  }
  func.func @transform_4(%arg0: i32) -> (i32, i32) {
    %c0_i32 = arith.constant 0 : i32
    %c0_i32_0 = arith.constant 0 : i32
    %c0_i32_1 = arith.constant 0 : i32
    return %c0_i32, %c0_i32_0 : i32, i32
  }
  func.func @transform_5(%arg0: i32) -> (i32, i32) {
    %c0_i32 = arith.constant 0 : i32
    %c0_i32_0 = arith.constant 0 : i32
    %c0_i32_1 = arith.constant 0 : i32
    return %c0_i32, %c0_i32_0 : i32, i32
  }
  func.func @transform_6(%arg0: i32) -> (i32, i32) {
    %c0_i32 = arith.constant 0 : i32
    %c0_i32_0 = arith.constant 0 : i32
    %c0_i32_1 = arith.constant 0 : i32
    return %c0_i32, %c0_i32_0 : i32, i32
  }
  func.func @transform_7(%arg0: i32) -> (i32, i32) {
    %c0_i32 = arith.constant 0 : i32
    %c0_i32_0 = arith.constant 0 : i32
    %c0_i32_1 = arith.constant 0 : i32
    return %c0_i32, %c0_i32_0 : i32, i32
  }
  func.func @transform_8(%arg0: i32) -> (i32, i32) {
    %c0_i32 = arith.constant 0 : i32
    %c0_i32_0 = arith.constant 0 : i32
    %c0_i32_1 = arith.constant 0 : i32
    return %c0_i32, %c0_i32_0 : i32, i32
  }
  func.func @transform_9(%arg0: i32) -> (i32, i32) {
    %c0_i32 = arith.constant 0 : i32
    %c0_i32_0 = arith.constant 0 : i32
    %c0_i32_1 = arith.constant 0 : i32
    return %c0_i32, %c0_i32_0 : i32, i32
  }
  func.func @transform_10(%arg0: i32) -> (i32, i32) {
    %c0_i32 = arith.constant 0 : i32
    %c0_i32_0 = arith.constant 0 : i32
    %c0_i32_1 = arith.constant 0 : i32
    return %c0_i32, %c0_i32_0 : i32, i32
  }
  func.func @transform_11(%arg0: i32) -> (i32, i32) {
    %c0_i32 = arith.constant 0 : i32
    %c0_i32_0 = arith.constant 0 : i32
    %c0_i32_1 = arith.constant 0 : i32
    return %c0_i32, %c0_i32_0 : i32, i32
  }
  func.func @transform_12(%arg0: i32) -> (i32, i32) {
    %c0_i32 = arith.constant 0 : i32
    %c0_i32_0 = arith.constant 0 : i32
    %c0_i32_1 = arith.constant 0 : i32
    return %c0_i32, %c0_i32_0 : i32, i32
  }
  func.func @transform_13(%arg0: i32) -> (i32, i32) {
    %c0_i32 = arith.constant 0 : i32
    %c0_i32_0 = arith.constant 0 : i32
    %c0_i32_1 = arith.constant 0 : i32
    return %c0_i32, %c0_i32_0 : i32, i32
  }
  func.func @transform_14(%arg0: i32) -> (i32, i32) {
    %c0_i32 = arith.constant 0 : i32
    %c0_i32_0 = arith.constant 0 : i32
    return %arg0, %c0_i32 : i32, i32
  }
}

</mosaic_0001>

<llo_original>
// kernel: tempcnn_forward.1
$region0: #{tempcnn_forward.1}
  #allocation0 [shape = 'u32[]', space=smem, size = 0x4, offset = 0x4, fixed_abs, tag = 'smem constant byte address 0x4 - core index']
  #allocation1 [shape = 'u32[72,128]{1,0:T(1,128)}', space=vmem, size = 0x9000, scoped, tag = 'internal scratch']
  #allocation2 [shape = 'f32[32,20]{1,0:T(8,128)}', space=vmem, size = 0x4000, scoped, tag = 'scratch operand']
  #allocation3 [shape = 'f32[32,160]{1,0:T(8,128)}', space=vmem, size = 0x8000, scoped, tag = 'scratch operand']
  #allocation4 [shape = 'f32[2,512]{1,0:T(2,128)}', space=vmem, size = 0x1000, scoped, tag = 'scratch operand']
  #allocation5 [shape = 'f32[1,1]{1,0:T(1,128)S(1)}', space=vmem, size = 0x200, scoped, tag = 'scoped memory for tempcnn_forward.1']
  %s0 = inlined_call_operand.vmem [shape: f32[32,4], index: 0, kind: input, shape index: {}]
  %s1 = inlined_call_operand.vmem [shape: f32[20,32], index: 1, kind: input, shape index: {}]
  %s2 = inlined_call_operand.vmem [shape: f32[1,32], index: 2, kind: input, shape index: {}]
  %s3 = inlined_call_operand.vmem [shape: f32[1,32], index: 3, kind: input, shape index: {}]
  %s4 = inlined_call_operand.vmem [shape: f32[160,32], index: 4, kind: input, shape index: {}]
  %s5 = inlined_call_operand.vmem [shape: f32[1,32], index: 5, kind: input, shape index: {}]
  %s6 = inlined_call_operand.vmem [shape: f32[1,32], index: 6, kind: input, shape index: {}]
  %s7 = inlined_call_operand.vmem [shape: f32[160,32], index: 7, kind: input, shape index: {}]
  %s8 = inlined_call_operand.vmem [shape: f32[1,32], index: 8, kind: input, shape index: {}]
  %s9 = inlined_call_operand.vmem [shape: f32[1,32], index: 9, kind: input, shape index: {}]
  %s10 = inlined_call_operand.hbm [shape: f32[512,128], index: 10, kind: input, shape index: {}]
  %s11 = inlined_call_operand.vmem [shape: f32[1,128], index: 11, kind: input, shape index: {}]
  %s12 = inlined_call_operand.vmem [shape: f32[128,1], index: 12, kind: input, shape index: {}]
  %s13 = inlined_call_operand.<no memory space> [shape: f32[1,1], index: 13, kind: input, shape index: {}]
  %s14 = inlined_call_operand.vmem [shape: f32[2,1], index: 14, kind: output, shape index: {}]
  %s15 = sld [smem:[#allocation0]]
  $region70: #{tempcnn_forward.1} parent=0
    _
  %s17 = ssub.s32 1, %s15
  %s18 = scalar_select 0, %s17, %s15
  %v19 = vstv %s13
  %20 = vst [vmem:[#allocation5] sm:$0x1] %v19
  $region1: #{tempcnn_forward.1} parent=0
    #allocation6 [shape = 'u8[262144]{0}', space=vmem, size = 0x40000, scoped, tag = 'input window, operand 10, single buffered']
    #allocation7 [shape = 's32[1]{0}', space=sflag, size = 0x4, scoped, tag = 'scoped memory for tempcnn_forward.1']
    %21 = vsyncpa [#allocation7], 0
    // Predicated region
    $region2: #{tempcnn_forward.1} parent=1 // pred_check
      _
    $region3: #{tempcnn_forward.1} parent=1 // pred_check_branch
      %23 = sbr.rel (0) target = $region5
    $region4: #{tempcnn_forward.1} parent=1 // pred_region
      _
    $region5: #{tempcnn_forward.1} parent=1 // pred_fallthru
      _
    // Predicated region
    $region6: #{tempcnn_forward.1} parent=1 // pred_check
      _
    $region7: #{tempcnn_forward.1} parent=1 // pred_check_branch
      %25 = sbr.rel (0) target = $region9
    $region8: #{tempcnn_forward.1} parent=1 // pred_region
      _
    $region9: #{tempcnn_forward.1} parent=1 // pred_fallthru
      _
    // Predicated region
    $region10: #{tempcnn_forward.1} parent=1 // pred_check
      _
    $region11: #{tempcnn_forward.1} parent=1 // pred_check_branch
      %27 = sbr.rel (0) target = $region13
    $region12: #{tempcnn_forward.1} parent=1 // pred_region
      _
    $region13: #{tempcnn_forward.1} parent=1 // pred_fallthru
      _
    // Predicated region
    $region14: #{tempcnn_forward.1} parent=1 // pred_check
      _
    $region15: #{tempcnn_forward.1} parent=1 // pred_check_branch
      %29 = sbr.rel (0) target = $region17
    $region16: #{tempcnn_forward.1} parent=1 // pred_region
      _
    $region17: #{tempcnn_forward.1} parent=1 // pred_fallthru
      _
    // Predicated region
    $region18: #{tempcnn_forward.1} parent=1 // pred_check
      _
    $region19: #{tempcnn_forward.1} parent=1 // pred_check_branch
      %31 = sbr.rel (0) target = $region21
    $region20: #{tempcnn_forward.1} parent=1 // pred_region
      _
    $region21: #{tempcnn_forward.1} parent=1 // pred_fallthru
      _
    // Predicated region
    $region22: #{tempcnn_forward.1} parent=1 // pred_check
      _
    $region23: #{tempcnn_forward.1} parent=1 // pred_check_branch
      %33 = sbr.rel (0) target = $region25
    $region24: #{tempcnn_forward.1} parent=1 // pred_region
      _
    $region25: #{tempcnn_forward.1} parent=1 // pred_fallthru
      _
    // Predicated region
    $region26: #{tempcnn_forward.1} parent=1 // pred_check
      _
    $region27: #{tempcnn_forward.1} parent=1 // pred_check_branch
      %35 = sbr.rel (0) target = $region29
    $region28: #{tempcnn_forward.1} parent=1 // pred_region
      _
    $region29: #{tempcnn_forward.1} parent=1 // pred_fallthru
      _
    // Predicated region
    $region30: #{tempcnn_forward.1} parent=1 // pred_check
      _
    $region31: #{tempcnn_forward.1} parent=1 // pred_check_branch
      %37 = sbr.rel (0) target = $region33
    $region32: #{tempcnn_forward.1} parent=1 // pred_region
      _
    $region33: #{tempcnn_forward.1} parent=1 // pred_fallthru
      _
    // Predicated region
    $region34: #{tempcnn_forward.1} parent=1 // pred_check
      _
    $region35: #{tempcnn_forward.1} parent=1 // pred_check_branch
      %39 = sbr.rel (0) target = $region37
    $region36: #{tempcnn_forward.1} parent=1 // pred_region
      _
    $region37: #{tempcnn_forward.1} parent=1 // pred_fallthru
      _
    // Predicated region
    $region38: #{tempcnn_forward.1} parent=1 // pred_check
      _
    $region39: #{tempcnn_forward.1} parent=1 // pred_check_branch
      %41 = sbr.rel (0) target = $region41
    $region40: #{tempcnn_forward.1} parent=1 // pred_region
      _
    $region41: #{tempcnn_forward.1} parent=1 // pred_fallthru
      _
    // Predicated region
    $region42: #{tempcnn_forward.1} parent=1 // pred_check
      _
    $region43: #{tempcnn_forward.1} parent=1 // pred_check_branch
      %43 = sbr.rel (0) target = $region45
    $region44: #{tempcnn_forward.1} parent=1 // pred_region
      %45 = vsyncadd [#allocation7], 0
      %s46 = sshll.u32 %s10, 4
      %s47 = int_to_ptr.hbm [resolvable:$true] %s46
      %s48 = sshll.u32 [#allocation6], 4
      %s49 = int_to_ptr.vmem [resolvable:$true] %s48
      %54 = dma.hbm_to_vmem [thread:$0]  %s47, 8192, %s49, [#allocation7], 128, 128, 8
    $region45: #{tempcnn_forward.1} parent=1 // pred_fallthru
      _
    // Predicated region
    $region46: #{tempcnn_forward.1} parent=1 // pred_check
      _
    $region47: #{tempcnn_forward.1} parent=1 // pred_check_branch
      %56 = sbr.rel (0) target = $region49
    $region48: #{tempcnn_forward.1} parent=1 // pred_region
      _
    $region49: #{tempcnn_forward.1} parent=1 // pred_fallthru
      _
    // Predicated region
    $region50: #{tempcnn_forward.1} parent=1 // pred_check
      _
    $region51: #{tempcnn_forward.1} parent=1 // pred_check_branch
      %58 = sbr.rel (0) target = $region53
    $region52: #{tempcnn_forward.1} parent=1 // pred_region
      _
    $region53: #{tempcnn_forward.1} parent=1 // pred_fallthru
      _
    // Predicated region
    $region54: #{tempcnn_forward.1} parent=1 // pred_check
      _
    $region55: #{tempcnn_forward.1} parent=1 // pred_check_branch
      %60 = sbr.rel (0) target = $region57
    $region56: #{tempcnn_forward.1} parent=1 // pred_region
      _
    $region57: #{tempcnn_forward.1} parent=1 // pred_fallthru
      _
    // Predicated region
    $region58: #{tempcnn_forward.1} parent=1 // pred_check
      _
    $region59: #{tempcnn_forward.1} parent=1 // pred_check_branch
      %62 = sbr.rel (0) target = $region61
    $region60: #{tempcnn_forward.1} parent=1 // pred_region
      %64 = dma.done [#allocation7], 8192
    $region61: #{tempcnn_forward.1} parent=1 // pred_fallthru
      _
    %vm65 = vcmask 162816
    %66 = vst.msk [vmem:[#allocation2] sm:$0xff] %vm65, 0.0
    %67 = vst.msk [vmem:[#allocation2 + $0x8] sm:$0xff] %vm65, 0.0
    %68 = vst.msk [vmem:[#allocation2 + $0x10] sm:$0xff] %vm65, 0.0
    %69 = vst.msk [vmem:[#allocation2 + $0x18] sm:$0xff] %vm65, 0.0
    %70 = vst [vmem:[#allocation3] sm:$0xff] 0.0
    %vm71 = vcmask 261120
    %72 = vst.msk [vmem:[#allocation3 + $0x8] sm:$0xff] %vm71, 0.0
    %73 = vst [vmem:[#allocation3 + $0x10] sm:$0xff] 0.0
    %74 = vst.msk [vmem:[#allocation3 + $0x18] sm:$0xff] %vm71, 0.0
    %75 = vst [vmem:[#allocation3 + $0x20] sm:$0xff] 0.0
    %76 = vst.msk [vmem:[#allocation3 + $0x28] sm:$0xff] %vm71, 0.0
    %77 = vst [vmem:[#allocation3 + $0x30] sm:$0xff] 0.0
    %78 = vst.msk [vmem:[#allocation3 + $0x38] sm:$0xff] %vm71, 0.0
    %v79 = vld [vmem:[%s0] sm:$0xff]
    %v80 = vld [vmem:[%s0 + $0x8] sm:$0xff]
    %v81 = vld [vmem:[%s0 + $0x10] sm:$0xff]
    %v82 = vld [vmem:[%s0 + $0x18] sm:$0xff]
    %vm83 = vcmask 31744
    %84 = vst.msk [vmem:[#allocation2 + $0x2] sm:$0xff] %vm83, %v79
    %vm85 = vcmask 29696
    %86 = vst.msk [vmem:[#allocation2 + $0xa] sm:$0x3f] %vm85, %v80
    %89 = vrot.lane.b32.xlu0 %v79, 4
    %v90 = vpop.permute.xlu0 %89
    %91 = vrot.lane.b32.xlu0 %v80, 4
    %v92 = vpop.permute.xlu0 %91
    %vm95 = vcmask 64544
    %96 = vst.msk [vmem:[#allocation2 + $0x1] sm:$0xff] %vm95, %v90
    %vm97 = vcmask 63520
    %98 = vst.msk [vmem:[#allocation2 + $0x9] sm:$0x7f] %vm97, %v92
    %99 = vrot.lane.b32.xlu0 %v79, 8
    %v100 = vpop.permute.xlu0 %99
    %101 = vrot.lane.b32.xlu0 %v80, 8
    %v102 = vpop.permute.xlu0 %101
    %vm105 = vcmask 97344
    %106 = vst.msk [vmem:[#allocation2] sm:$0xff] %vm105, %v100
    %107 = vst.msk [vmem:[#allocation2 + $0x8] sm:$0xff] %vm105, %v102
    %108 = vrot.lane.b32.xlu0 %v79, 12
    %v109 = vpop.permute.xlu0 %108
    %110 = vrot.lane.b32.xlu0 %v80, 12
    %v111 = vpop.permute.xlu0 %110
    %vm114 = vcmask 130145
    %115 = vst.msk [vmem:[#allocation2 - $0x1] sm:$0xfe] %vm114, %v109
    %vm116 = vcmask 130144
    %117 = vst.msk [vmem:[#allocation2 + $0x7] sm:$0xff] %vm116, %v111
    %118 = vrot.lane.b32.xlu0 %v79, 16
    %v119 = vpop.permute.xlu0 %118
    %120 = vrot.lane.b32.xlu0 %v80, 16
    %v121 = vpop.permute.xlu0 %120
    %vm124 = vcmask 162946
    %125 = vst.msk [vmem:[#allocation2 - $0x2] sm:$0xfc] %vm124, %v119
    %vm126 = vcmask 162944
    %127 = vst.msk [vmem:[#allocation2 + $0x6] sm:$0xff] %vm126, %v121
    %128 = vst.msk [vmem:[#allocation2 + $0x12] sm:$0xff] %vm83, %v81
    %129 = vst.msk [vmem:[#allocation2 + $0x1a] sm:$0x3f] %vm85, %v82
    %132 = vrot.lane.b32.xlu0 %v81, 4
    %v133 = vpop.permute.xlu0 %132
    %134 = vrot.lane.b32.xlu0 %v82, 4
    %v135 = vpop.permute.xlu0 %134
    %138 = vst.msk [vmem:[#allocation2 + $0x11] sm:$0xff] %vm95, %v133
    %139 = vst.msk [vmem:[#allocation2 + $0x19] sm:$0x7f] %vm97, %v135
    %140 = vrot.lane.b32.xlu0 %v81, 8
    %v141 = vpop.permute.xlu0 %140
    %142 = vrot.lane.b32.xlu0 %v82, 8
    %v143 = vpop.permute.xlu0 %142
    %146 = vst.msk [vmem:[#allocation2 + $0x10] sm:$0xff] %vm105, %v141
    %147 = vst.msk [vmem:[#allocation2 + $0x18] sm:$0xff] %vm105, %v143
    %148 = vrot.lane.b32.xlu0 %v81, 12
    %v149 = vpop.permute.xlu0 %148
    %150 = vrot.lane.b32.xlu0 %v82, 12
    %v151 = vpop.permute.xlu0 %150
    %154 = vst.msk [vmem:[#allocation2 + $0xf] sm:$0xfe] %vm114, %v149
    %155 = vst.msk [vmem:[#allocation2 + $0x17] sm:$0xff] %vm116, %v151
    %156 = vrot.lane.b32.xlu0 %v81, 16
    %v157 = vpop.permute.xlu0 %156
    %158 = vrot.lane.b32.xlu0 %v82, 16
    %v159 = vpop.permute.xlu0 %158
    %162 = vst.msk [vmem:[#allocation2 + $0xe] sm:$0xfc] %vm124, %v157
    %163 = vst.msk [vmem:[#allocation2 + $0x16] sm:$0xff] %vm126, %v159
    %v164 = vld [vmem:[#allocation2] sm:$0xff]
    %v165 = vld [vmem:[#allocation2 + $0x8] sm:$0xff]
    %v166 = vld [vmem:[#allocation2 + $0x10] sm:$0xff]
    %v167 = vld [vmem:[#allocation2 + $0x18] sm:$0xff]
    %v168 = vld [vmem:[%s1] sm:$0xff]
    %v169 = vld [vmem:[%s1 + $0x8] sm:$0xff]
    %v170 = vld [vmem:[%s1 + $0x10] sm:$0xf]
    %v172 = vsel %vm65, %v164, 0
    %v175 = vsel %vm65, %v165, 0
    %v178 = vsel %vm65, %v166, 0
    %v181 = vsel %vm65, %v167, 0
    %vm183 = vcmask 1043456
    %v185 = vsel %vm183, %v170, 0
    %187 = vmatpush.msra.mxu0 0.0
    %188 = vmatpush.msra.mxu0 0.0
    %189 = vmatpush.msra.mxu0 0.0
    %190 = vmatpush.msra.mxu0 0.0
    %191 = vmatpush.msra.mxu0 0.0
    %192 = vmatpush.msra.mxu0 0.0
    %193 = vmatpush.msra.mxu0 0.0
    %194 = vmatpush.msra.mxu0 0.0
    %195 = vmatpush.msra.mxu0 0.0
    %196 = vmatpush.msra.mxu0 0.0
    %197 = vmatpush.msra.mxu0 0.0
    %198 = vmatpush.msra.mxu0 0.0
    %199 = vmatpush.msra.mxu0 0.0
    %200 = vmatpush.msra.mxu0 %v185
    %201 = vmatpush.msra.mxu0 %v169
    %202 = vmatpush.msra.mxu0 %v168
    %203 = vmatmul.f32.gmra.mxu0 %v172
    %v204 = vpop.f32.mrf.mxu0
    %v205 = vadd.f32 0.0, %v204
    %206 = vmatmul.f32.gmra.mxu0 %v175
    %v207 = vpop.f32.mrf.mxu0
    %v208 = vadd.f32 0.0, %v207
    %209 = vmatmul.f32.gmra.mxu0 %v178
    %v210 = vpop.f32.mrf.mxu0
    %v211 = vadd.f32 0.0, %v210
    %212 = vmatmul.f32.gmra.mxu0 %v181
    %v213 = vpop.f32.mrf.mxu0
    %v214 = vadd.f32 0.0, %v213
    %215 = vdwg.mxu0
    %v216 = vld [vmem:[%s2] sm:$0x1]
    %v218 = vperm.slane %v216, 0
    %v220 = vmul.f32 %v205, %v218
    %v221 = vmul.f32 %v208, %v218
    %v222 = vmul.f32 %v211, %v218
    %v223 = vmul.f32 %v214, %v218
    %v224 = vld [vmem:[%s3] sm:$0x1]
    %v226 = vperm.slane %v224, 0
    %v228 = vadd.f32 %v220, %v226
    %v229 = vadd.f32 %v221, %v226
    %v230 = vadd.f32 %v222, %v226
    %v231 = vadd.f32 %v223, %v226
    %v232 = vmax.f32 %v228, 0.0
    %v233 = vmax.f32 %v229, 0.0
    %v234 = vmax.f32 %v230, 0.0
    %v235 = vmax.f32 %v231, 0.0
    %vm238 = vcmask 1041408
    %v239 = vrot.slane %v232, 6
    %v240 = vrot.slane %v233, 6
    %v241 = vsel %vm238, %v239, %v240
    %vm244 = vcmask 261122
    %245 = vst.msk [vmem:[#allocation3] sm:$0xfc] %vm244, %v239
    %246 = vst.msk [vmem:[#allocation3 + $0x10] sm:$0xff] %vm71, %v241
    %vm247 = vcmask 1040384
    %v248 = vrot.slane %v232, 7
    %v249 = vrot.slane %v233, 7
    %v250 = vsel %vm247, %v248, %v249
    %251 = vrot.lane.b32.xlu0 %v248, 32
    %v252 = vpop.permute.xlu0 %251
    %253 = vrot.lane.b32.xlu0 %v250, 32
    %v254 = vpop.permute.xlu0 %253
    %vm257 = vcmask 523521
    %258 = vst.msk [vmem:[#allocation3] sm:$0xfe] %vm257, %v252
    %vm259 = vcmask 523520
    %260 = vst.msk [vmem:[#allocation3 + $0x10] sm:$0xff] %vm259, %v254
    %261 = vrot.lane.b32.xlu0 %v232, 64
    %v262 = vpop.permute.xlu0 %261
    %263 = vrot.lane.b32.xlu0 %v233, 64
    %v264 = vpop.permute.xlu0 %263
    %vm267 = vcmask 785920
    %268 = vst.msk [vmem:[#allocation3] sm:$0xff] %vm267, %v262
    %269 = vst.msk [vmem:[#allocation3 + $0x10] sm:$0xff] %vm267, %v264
    %vm270 = vcmask 1046528
    %v271 = vrot.slane %v232, 1
    %v272 = vrot.slane %v233, 1
    %v273 = vsel %vm270, %v271, %v272
    %274 = vrot.lane.b32.xlu0 %v273, 96
    %v275 = vpop.permute.xlu0 %274
    %276 = vrot.lane.b32.xlu0 %v272, 96
    %v277 = vpop.permute.xlu0 %276
    %vm280 = vcmask 1048320
    %281 = vst.msk [vmem:[#allocation3] sm:$0xff] %vm280, %v275
    %vm282 = vcmask 1047296
    %283 = vst.msk [vmem:[#allocation3 + $0x10] sm:$0x7f] %vm282, %v277
    %vm284 = vcmask 1045504
    %v285 = vrot.slane %v232, 2
    %v286 = vrot.slane %v233, 2
    %v287 = vsel %vm284, %v285, %v286
    %290 = vst.msk [vmem:[#allocation3 + $0x8] sm:$0xff] %vm71, %v287
    %vm291 = vcmask 259072
    %292 = vst.msk [vmem:[#allocation3 + $0x18] sm:$0x3f] %vm291, %v286
    %v295 = vrot.slane %v234, 6
    %v296 = vrot.slane %v235, 6
    %v297 = vsel %vm238, %v295, %v296
    %300 = vst.msk [vmem:[#allocation3 + $0x20] sm:$0xfc] %vm244, %v295
    %301 = vst.msk [vmem:[#allocation3 + $0x30] sm:$0xff] %vm71, %v297
    %v302 = vrot.slane %v234, 7
    %v303 = vrot.slane %v235, 7
    %v304 = vsel %vm247, %v302, %v303
    %305 = vrot.lane.b32.xlu0 %v302, 32
    %v306 = vpop.permute.xlu0 %305
    %307 = vrot.lane.b32.xlu0 %v304, 32
    %v308 = vpop.permute.xlu0 %307
    %311 = vst.msk [vmem:[#allocation3 + $0x20] sm:$0xfe] %vm257, %v306
    %312 = vst.msk [vmem:[#allocation3 + $0x30] sm:$0xff] %vm259, %v308
    %313 = vrot.lane.b32.xlu0 %v234, 64
    %v314 = vpop.permute.xlu0 %313
    %315 = vrot.lane.b32.xlu0 %v235, 64
    %v316 = vpop.permute.xlu0 %315
    %319 = vst.msk [vmem:[#allocation3 + $0x20] sm:$0xff] %vm267, %v314
    %320 = vst.msk [vmem:[#allocation3 + $0x30] sm:$0xff] %vm267, %v316
    %v321 = vrot.slane %v234, 1
    %v322 = vrot.slane %v235, 1
    %v323 = vsel %vm270, %v321, %v322
    %324 = vrot.lane.b32.xlu0 %v323, 96
    %v325 = vpop.permute.xlu0 %324
    %326 = vrot.lane.b32.xlu0 %v322, 96
    %v327 = vpop.permute.xlu0 %326
    %330 = vst.msk [vmem:[#allocation3 + $0x20] sm:$0xff] %vm280, %v325
    %331 = vst.msk [vmem:[#allocation3 + $0x30] sm:$0x7f] %vm282, %v327
    %v332 = vrot.slane %v234, 2
    %v333 = vrot.slane %v235, 2
    %v334 = vsel %vm284, %v332, %v333
    %337 = vst.msk [vmem:[#allocation3 + $0x28] sm:$0xff] %vm71, %v334
    %338 = vst.msk [vmem:[#allocation3 + $0x38] sm:$0x3f] %vm291, %v333
    %v339 = vld [vmem:[#allocation3] sm:$0xff]
    %v340 = vld [vmem:[#allocation3 + $0x8] sm:$0xff]
    %v341 = vld [vmem:[#allocation3 + $0x10] sm:$0xff]
    %v342 = vld [vmem:[#allocation3 + $0x18] sm:$0xff]
    %v343 = vld [vmem:[#allocation3 + $0x20] sm:$0xff]
    %v344 = vld [vmem:[#allocation3 + $0x28] sm:$0xff]
    %v345 = vld [vmem:[#allocation3 + $0x30] sm:$0xff]
    %v346 = vld [vmem:[#allocation3 + $0x38] sm:$0xff]
    %v347 = vld [vmem:[%s4] sm:$0xff]
    %v348 = vld [vmem:[%s4 + $0x8] sm:$0xff]
    %v349 = vld [vmem:[%s4 + $0x10] sm:$0xff]
    %v350 = vld [vmem:[%s4 + $0x18] sm:$0xff]
    %v351 = vld [vmem:[%s4 + $0x20] sm:$0xff]
    %v352 = vld [vmem:[%s4 + $0x28] sm:$0xff]
    %v353 = vld [vmem:[%s4 + $0x30] sm:$0xff]
    %v354 = vld [vmem:[%s4 + $0x38] sm:$0xff]
    %v355 = vld [vmem:[%s4 + $0x40] sm:$0xff]
    %v356 = vld [vmem:[%s4 + $0x48] sm:$0xff]
    %v357 = vld [vmem:[%s4 + $0x50] sm:$0xff]
    %v358 = vld [vmem:[%s4 + $0x58] sm:$0xff]
    %v359 = vld [vmem:[%s4 + $0x60] sm:$0xff]
    %v360 = vld [vmem:[%s4 + $0x68] sm:$0xff]
    %v361 = vld [vmem:[%s4 + $0x70] sm:$0xff]
    %v362 = vld [vmem:[%s4 + $0x78] sm:$0xff]
    %v363 = vld [vmem:[%s4 + $0x80] sm:$0xff]
    %v364 = vld [vmem:[%s4 + $0x88] sm:$0xff]
    %v365 = vld [vmem:[%s4 + $0x90] sm:$0xff]
    %v366 = vld [vmem:[%s4 + $0x98] sm:$0xff]
    %v368 = vsel %vm71, %v340, 0
    %v371 = vsel %vm71, %v342, 0
    %v374 = vsel %vm71, %v344, 0
    %v377 = vsel %vm71, %v346, 0
    %379 = vmatpush.msra.mxu0 %v362
    %380 = vmatpush.msra.mxu0 %v361
    %381 = vmatpush.msra.mxu0 %v360
    %382 = vmatpush.msra.mxu0 %v359
    %383 = vmatpush.msra.mxu0 %v358
    %384 = vmatpush.msra.mxu0 %v357
    %385 = vmatpush.msra.mxu0 %v356
    %386 = vmatpush.msra.mxu0 %v355
    %387 = vmatpush.msra.mxu0 %v354
    %388 = vmatpush.msra.mxu0 %v353
    %389 = vmatpush.msra.mxu0 %v352
    %390 = vmatpush.msra.mxu0 %v351
    %391 = vmatpush.msra.mxu0 %v350
    %392 = vmatpush.msra.mxu0 %v349
    %393 = vmatpush.msra.mxu0 %v348
    %394 = vmatpush.msra.mxu0 %v347
    %395 = vmatmul.f32.gmra.mxu0 %v339
    %v396 = vpop.f32.mrf.mxu0
    %v397 = vadd.f32 0.0, %v396
    %398 = vmatmul.f32.gmra.mxu0 %v341
    %v399 = vpop.f32.mrf.mxu0
    %v400 = vadd.f32 0.0, %v399
    %401 = vmatmul.f32.gmra.mxu0 %v343
    %v402 = vpop.f32.mrf.mxu0
    %v403 = vadd.f32 0.0, %v402
    %404 = vmatmul.f32.gmra.mxu0 %v345
    %v405 = vpop.f32.mrf.mxu0
    %v406 = vadd.f32 0.0, %v405
    %407 = vdwg.mxu0
    %408 = vmatpush.msra.mxu0 0.0
    %409 = vmatpush.msra.mxu0 0.0
    %410 = vmatpush.msra.mxu0 0.0
    %411 = vmatpush.msra.mxu0 0.0
    %412 = vmatpush.msra.mxu0 0.0
    %413 = vmatpush.msra.mxu0 0.0
    %414 = vmatpush.msra.mxu0 0.0
    %415 = vmatpush.msra.mxu0 0.0
    %416 = vmatpush.msra.mxu0 0.0
    %417 = vmatpush.msra.mxu0 0.0
    %418 = vmatpush.msra.mxu0 0.0
    %419 = vmatpush.msra.mxu0 0.0
    %420 = vmatpush.msra.mxu0 %v366
    %421 = vmatpush.msra.mxu0 %v365
    %422 = vmatpush.msra.mxu0 %v364
    %423 = vmatpush.msra.mxu0 %v363
    %424 = vmatmul.f32.gmra.mxu0 %v368
    %v425 = vpop.f32.mrf.mxu0
    %v426 = vadd.f32 %v397, %v425
    %427 = vmatmul.f32.gmra.mxu0 %v371
    %v428 = vpop.f32.mrf.mxu0
    %v429 = vadd.f32 %v400, %v428
    %430 = vmatmul.f32.gmra.mxu0 %v374
    %v431 = vpop.f32.mrf.mxu0
    %v432 = vadd.f32 %v403, %v431
    %433 = vmatmul.f32.gmra.mxu0 %v377
    %v434 = vpop.f32.mrf.mxu0
    %v435 = vadd.f32 %v406, %v434
    %436 = vdwg.mxu0
    %v437 = vld [vmem:[%s5] sm:$0x1]
    %v439 = vperm.slane %v437, 0
    %v441 = vmul.f32 %v426, %v439
    %v442 = vmul.f32 %v429, %v439
    %v443 = vmul.f32 %v432, %v439
    %v444 = vmul.f32 %v435, %v439
    %v445 = vld [vmem:[%s6] sm:$0x1]
    %v447 = vperm.slane %v445, 0
    %v449 = vadd.f32 %v441, %v447
    %v450 = vadd.f32 %v442, %v447
    %v451 = vadd.f32 %v443, %v447
    %v452 = vadd.f32 %v444, %v447
    %v453 = vmax.f32 %v449, 0.0
    %v454 = vmax.f32 %v450, 0.0
    %v455 = vmax.f32 %v451, 0.0
    %v456 = vmax.f32 %v452, 0.0
    %v459 = vrot.slane %v453, 6
    %v460 = vrot.slane %v454, 6
    %v461 = vsel %vm238, %v459, %v460
    %464 = vst.msk [vmem:[#allocation3] sm:$0xfc] %vm244, %v459
    %465 = vst.msk [vmem:[#allocation3 + $0x10] sm:$0xff] %vm71, %v461
    %v466 = vrot.slane %v453, 7
    %v467 = vrot.slane %v454, 7
    %v468 = vsel %vm247, %v466, %v467
    %469 = vrot.lane.b32.xlu0 %v466, 32
    %v470 = vpop.permute.xlu0 %469
    %471 = vrot.lane.b32.xlu0 %v468, 32
    %v472 = vpop.permute.xlu0 %471
    %475 = vst.msk [vmem:[#allocation3] sm:$0xfe] %vm257, %v470
    %476 = vst.msk [vmem:[#allocation3 + $0x10] sm:$0xff] %vm259, %v472
    %477 = vrot.lane.b32.xlu0 %v453, 64
    %v478 = vpop.permute.xlu0 %477
    %479 = vrot.lane.b32.xlu0 %v454, 64
    %v480 = vpop.permute.xlu0 %479
    %483 = vst.msk [vmem:[#allocation3] sm:$0xff] %vm267, %v478
    %484 = vst.msk [vmem:[#allocation3 + $0x10] sm:$0xff] %vm267, %v480
    %v485 = vrot.slane %v453, 1
    %v486 = vrot.slane %v454, 1
    %v487 = vsel %vm270, %v485, %v486
    %488 = vrot.lane.b32.xlu0 %v487, 96
    %v489 = vpop.permute.xlu0 %488
    %490 = vrot.lane.b32.xlu0 %v486, 96
    %v491 = vpop.permute.xlu0 %490
    %494 = vst.msk [vmem:[#allocation3] sm:$0xff] %vm280, %v489
    %495 = vst.msk [vmem:[#allocation3 + $0x10] sm:$0x7f] %vm282, %v491
    %v496 = vrot.slane %v453, 2
    %v497 = vrot.slane %v454, 2
    %v498 = vsel %vm284, %v496, %v497
    %501 = vst.msk [vmem:[#allocation3 + $0x8] sm:$0xff] %vm71, %v498
    %502 = vst.msk [vmem:[#allocation3 + $0x18] sm:$0x3f] %vm291, %v497
    %v505 = vrot.slane %v455, 6
    %v506 = vrot.slane %v456, 6
    %v507 = vsel %vm238, %v505, %v506
    %510 = vst.msk [vmem:[#allocation3 + $0x20] sm:$0xfc] %vm244, %v505
    %511 = vst.msk [vmem:[#allocation3 + $0x30] sm:$0xff] %vm71, %v507
    %v512 = vrot.slane %v455, 7
    %v513 = vrot.slane %v456, 7
    %v514 = vsel %vm247, %v512, %v513
    %515 = vrot.lane.b32.xlu0 %v512, 32
    %v516 = vpop.permute.xlu0 %515
    %517 = vrot.lane.b32.xlu0 %v514, 32
    %v518 = vpop.permute.xlu0 %517
    %521 = vst.msk [vmem:[#allocation3 + $0x20] sm:$0xfe] %vm257, %v516
    %522 = vst.msk [vmem:[#allocation3 + $0x30] sm:$0xff] %vm259, %v518
    %523 = vrot.lane.b32.xlu0 %v455, 64
    %v524 = vpop.permute.xlu0 %523
    %525 = vrot.lane.b32.xlu0 %v456, 64
    %v526 = vpop.permute.xlu0 %525
    %529 = vst.msk [vmem:[#allocation3 + $0x20] sm:$0xff] %vm267, %v524
    %530 = vst.msk [vmem:[#allocation3 + $0x30] sm:$0xff] %vm267, %v526
    %v531 = vrot.slane %v455, 1
    %v532 = vrot.slane %v456, 1
    %v533 = vsel %vm270, %v531, %v532
    %534 = vrot.lane.b32.xlu0 %v533, 96
    %v535 = vpop.permute.xlu0 %534
    %536 = vrot.lane.b32.xlu0 %v532, 96
    %v537 = vpop.permute.xlu0 %536
    %540 = vst.msk [vmem:[#allocation3 + $0x20] sm:$0xff] %vm280, %v535
    %541 = vst.msk [vmem:[#allocation3 + $0x30] sm:$0x7f] %vm282, %v537
    %v542 = vrot.slane %v455, 2
    %v543 = vrot.slane %v456, 2
    %v544 = vsel %vm284, %v542, %v543
    %547 = vst.msk [vmem:[#allocation3 + $0x28] sm:$0xff] %vm71, %v544
    %548 = vst.msk [vmem:[#allocation3 + $0x38] sm:$0x3f] %vm291, %v543
    %v549 = vld [vmem:[#allocation3] sm:$0xff]
    %v550 = vld [vmem:[#allocation3 + $0x8] sm:$0xff]
    %v551 = vld [vmem:[#allocation3 + $0x10] sm:$0xff]
    %v552 = vld [vmem:[#allocation3 + $0x18] sm:$0xff]
    %v553 = vld [vmem:[#allocation3 + $0x20] sm:$0xff]
    %v554 = vld [vmem:[#allocation3 + $0x28] sm:$0xff]
    %v555 = vld [vmem:[#allocation3 + $0x30] sm:$0xff]
    %v556 = vld [vmem:[#allocation3 + $0x38] sm:$0xff]
    %v557 = vld [vmem:[%s7] sm:$0xff]
    %v558 = vld [vmem:[%s7 + $0x8] sm:$0xff]
    %v559 = vld [vmem:[%s7 + $0x10] sm:$0xff]
    %v560 = vld [vmem:[%s7 + $0x18] sm:$0xff]
    %v561 = vld [vmem:[%s7 + $0x20] sm:$0xff]
    %v562 = vld [vmem:[%s7 + $0x28] sm:$0xff]
    %v563 = vld [vmem:[%s7 + $0x30] sm:$0xff]
    %v564 = vld [vmem:[%s7 + $0x38] sm:$0xff]
    %v565 = vld [vmem:[%s7 + $0x40] sm:$0xff]
    %v566 = vld [vmem:[%s7 + $0x48] sm:$0xff]
    %v567 = vld [vmem:[%s7 + $0x50] sm:$0xff]
    %v568 = vld [vmem:[%s7 + $0x58] sm:$0xff]
    %v569 = vld [vmem:[%s7 + $0x60] sm:$0xff]
    %v570 = vld [vmem:[%s7 + $0x68] sm:$0xff]
    %v571 = vld [vmem:[%s7 + $0x70] sm:$0xff]
    %v572 = vld [vmem:[%s7 + $0x78] sm:$0xff]
    %v573 = vld [vmem:[%s7 + $0x80] sm:$0xff]
    %v574 = vld [vmem:[%s7 + $0x88] sm:$0xff]
    %v575 = vld [vmem:[%s7 + $0x90] sm:$0xff]
    %v576 = vld [vmem:[%s7 + $0x98] sm:$0xff]
    %v578 = vsel %vm71, %v550, 0
    %v581 = vsel %vm71, %v552, 0
    %v584 = vsel %vm71, %v554, 0
    %v587 = vsel %vm71, %v556, 0
    %589 = vmatpush.msra.mxu0 %v572
    %590 = vmatpush.msra.mxu0 %v571
    %591 = vmatpush.msra.mxu0 %v570
    %592 = vmatpush.msra.mxu0 %v569
    %593 = vmatpush.msra.mxu0 %v568
    %594 = vmatpush.msra.mxu0 %v567
    %595 = vmatpush.msra.mxu0 %v566
    %596 = vmatpush.msra.mxu0 %v565
    %597 = vmatpush.msra.mxu0 %v564
    %598 = vmatpush.msra.mxu0 %v563
    %599 = vmatpush.msra.mxu0 %v562
    %600 = vmatpush.msra.mxu0 %v561
    %601 = vmatpush.msra.mxu0 %v560
    %602 = vmatpush.msra.mxu0 %v559
    %603 = vmatpush.msra.mxu0 %v558
    %604 = vmatpush.msra.mxu0 %v557
    %605 = vmatmul.f32.gmra.mxu0 %v549
    %v606 = vpop.f32.mrf.mxu0
    %v607 = vadd.f32 0.0, %v606
    %608 = vmatmul.f32.gmra.mxu0 %v551
    %v609 = vpop.f32.mrf.mxu0
    %v610 = vadd.f32 0.0, %v609
    %611 = vmatmul.f32.gmra.mxu0 %v553
    %v612 = vpop.f32.mrf.mxu0
    %v613 = vadd.f32 0.0, %v612
    %614 = vmatmul.f32.gmra.mxu0 %v555
    %v615 = vpop.f32.mrf.mxu0
    %v616 = vadd.f32 0.0, %v615
    %617 = vdwg.mxu0
    %618 = vmatpush.msra.mxu0 0.0
    %619 = vmatpush.msra.mxu0 0.0
    %620 = vmatpush.msra.mxu0 0.0
    %621 = vmatpush.msra.mxu0 0.0
    %622 = vmatpush.msra.mxu0 0.0
    %623 = vmatpush.msra.mxu0 0.0
    %624 = vmatpush.msra.mxu0 0.0
    %625 = vmatpush.msra.mxu0 0.0
    %626 = vmatpush.msra.mxu0 0.0
    %627 = vmatpush.msra.mxu0 0.0
    %628 = vmatpush.msra.mxu0 0.0
    %629 = vmatpush.msra.mxu0 0.0
    %630 = vmatpush.msra.mxu0 %v576
    %631 = vmatpush.msra.mxu0 %v575
    %632 = vmatpush.msra.mxu0 %v574
    %633 = vmatpush.msra.mxu0 %v573
    %634 = vmatmul.f32.gmra.mxu0 %v578
    %v635 = vpop.f32.mrf.mxu0
    %v636 = vadd.f32 %v607, %v635
    %637 = vmatmul.f32.gmra.mxu0 %v581
    %v638 = vpop.f32.mrf.mxu0
    %v639 = vadd.f32 %v610, %v638
    %640 = vmatmul.f32.gmra.mxu0 %v584
    %v641 = vpop.f32.mrf.mxu0
    %v642 = vadd.f32 %v613, %v641
    %643 = vmatmul.f32.gmra.mxu0 %v587
    %v644 = vpop.f32.mrf.mxu0
    %v645 = vadd.f32 %v616, %v644
    %646 = vdwg.mxu0
    %v647 = vld [vmem:[%s8] sm:$0x1]
    %v649 = vperm.slane %v647, 0
    %v651 = vmul.f32 %v636, %v649
    %v652 = vmul.f32 %v639, %v649
    %v653 = vmul.f32 %v642, %v649
    %v654 = vmul.f32 %v645, %v649
    %v655 = vld [vmem:[%s9] sm:$0x1]
    %v657 = vperm.slane %v655, 0
    %v659 = vadd.f32 %v651, %v657
    %v660 = vadd.f32 %v652, %v657
    %v661 = vadd.f32 %v653, %v657
    %v662 = vadd.f32 %v654, %v657
    %v663 = vmax.f32 %v659, 0.0
    %v664 = vmax.f32 %v660, 0.0
    %v665 = vmax.f32 %v661, 0.0
    %v666 = vmax.f32 %v662, 0.0
    %vm667 = vcmask 253952
    %668 = vst.msk [vmem:[#allocation4] sm:$0x1] %vm667, %v663
    %v670 = vrot.slane %v663, 7
    %v671 = vrot.slane %v670, 2
    %672 = vrot.lane.b32.xlu0 %v671, 32
    %v673 = vpop.permute.xlu0 %672
    %vm675 = vcmask 516352
    %676 = vst.msk [vmem:[#allocation4] sm:$0x1] %vm675, %v673
    %677 = vst.sshfl [vmem:[#allocation1] sm:$0xff pattern:$0x73625140] %v663
    %s678 = scalar_lea.vmem [#allocation1], 1
    %v679 = vld [vmem:[%s678] ss:$4 sm:$0xff]
    %680 = vrot.lane.b32.xlu0 %v679, 64
    %v681 = vpop.permute.xlu0 %680
    %vm683 = vcmask 778752
    %684 = vst.msk [vmem:[#allocation4] sm:$0x1] %vm683, %v681
    %685 = vst.sshfl [vmem:[#allocation1] sm:$0xff pattern:$0x73625140] %v663
    %s686 = scalar_lea.vmem [#allocation1], 1
    %v687 = vld [vmem:[%s686] ss:$4 sm:$0xff]
    %v688 = vrot.slane %v687, 7
    %v689 = vrot.slane %v688, 2
    %690 = vrot.lane.b32.xlu0 %v689, 96
    %v691 = vpop.permute.xlu0 %690
    %vm693 = vcmask 1041152
    %694 = vst.msk [vmem:[#allocation4] sm:$0x1] %vm693, %v691
    %695 = vst.sshfl [vmem:[#allocation1] sm:$0xff pattern:$0x73625140] %v663
    %s696 = scalar_lea.vmem [#allocation1], 2
    %v697 = vld [vmem:[%s696] ss:$4 sm:$0xff]
    %699 = vst.msk [vmem:[#allocation4 + $0x2] sm:$0x1] %vm667, %v697
    %700 = vst.sshfl [vmem:[#allocation1] sm:$0xff pattern:$0x73625140] %v663
    %s701 = scalar_lea.vmem [#allocation1], 2
    %v702 = vld [vmem:[%s701] ss:$4 sm:$0xff]
    %v703 = vrot.slane %v702, 7
    %v704 = vrot.slane %v703, 2
    %705 = vrot.lane.b32.xlu0 %v704, 32
    %v706 = vpop.permute.xlu0 %705
    %708 = vst.msk [vmem:[#allocation4 + $0x2] sm:$0x1] %vm675, %v706
    %709 = vst.sshfl [vmem:[#allocation1] sm:$0xff pattern:$0x73625140] %v663
    %s710 = scalar_lea.vmem [#allocation1], 3
    %v711 = vld [vmem:[%s710] ss:$4 sm:$0xff]
    %712 = vrot.lane.b32.xlu0 %v711, 64
    %v713 = vpop.permute.xlu0 %712
    %715 = vst.msk [vmem:[#allocation4 + $0x2] sm:$0x1] %vm683, %v713
    %716 = vst.sshfl [vmem:[#allocation1] sm:$0xff pattern:$0x73625140] %v663
    %s717 = scalar_lea.vmem [#allocation1], 3
    %v718 = vld [vmem:[%s717] ss:$4 sm:$0xff]
    %v719 = vrot.slane %v718, 7
    %v720 = vrot.slane %v719, 2
    %721 = vrot.lane.b32.xlu0 %v720, 96
    %v722 = vpop.permute.xlu0 %721
    %724 = vst.msk [vmem:[#allocation4 + $0x2] sm:$0x1] %vm693, %v722
    %725 = vst.msk [vmem:[#allocation4 + $0x4] sm:$0x1] %vm667, %v664
    %v727 = vrot.slane %v664, 7
    %v728 = vrot.slane %v727, 2
    %729 = vrot.lane.b32.xlu0 %v728, 32
    %v730 = vpop.permute.xlu0 %729
    %732 = vst.msk [vmem:[#allocation4 + $0x4] sm:$0x1] %vm675, %v730
    %733 = vst.sshfl [vmem:[#allocation1] sm:$0xff pattern:$0x73625140] %v664
    %s734 = scalar_lea.vmem [#allocation1], 1
    %v735 = vld [vmem:[%s734] ss:$4 sm:$0xff]
    %736 = vrot.lane.b32.xlu0 %v735, 64
    %v737 = vpop.permute.xlu0 %736
    %739 = vst.msk [vmem:[#allocation4 + $0x4] sm:$0x1] %vm683, %v737
    %740 = vst.sshfl [vmem:[#allocation1] sm:$0xff pattern:$0x73625140] %v664
    %s741 = scalar_lea.vmem [#allocation1], 1
    %v742 = vld [vmem:[%s741] ss:$4 sm:$0xff]
    %v743 = vrot.slane %v742, 7
    %v744 = vrot.slane %v743, 2
    %745 = vrot.lane.b32.xlu0 %v744, 96
    %v746 = vpop.permute.xlu0 %745
    %748 = vst.msk [vmem:[#allocation4 + $0x4] sm:$0x1] %vm693, %v746
    %749 = vst.sshfl [vmem:[#allocation1] sm:$0xff pattern:$0x73625140] %v664
    %s750 = scalar_lea.vmem [#allocation1], 2
    %v751 = vld [vmem:[%s750] ss:$4 sm:$0xff]
    %753 = vst.msk [vmem:[#allocation4 + $0x6] sm:$0x1] %vm667, %v751
    %754 = vst.sshfl [vmem:[#allocation1] sm:$0xff pattern:$0x73625140] %v664
    %s755 = scalar_lea.vmem [#allocation1], 2
    %v756 = vld [vmem:[%s755] ss:$4 sm:$0xff]
    %v757 = vrot.slane %v756, 7
    %v758 = vrot.slane %v757, 2
    %759 = vrot.lane.b32.xlu0 %v758, 32
    %v760 = vpop.permute.xlu0 %759
    %762 = vst.msk [vmem:[#allocation4 + $0x6] sm:$0x1] %vm675, %v760
    %763 = vst.sshfl [vmem:[#allocation1] sm:$0xff pattern:$0x73625140] %v664
    %s764 = scalar_lea.vmem [#allocation1], 3
    %v765 = vld [vmem:[%s764] ss:$4 sm:$0xff]
    %766 = vrot.lane.b32.xlu0 %v765, 64
    %v767 = vpop.permute.xlu0 %766
    %769 = vst.msk [vmem:[#allocation4 + $0x6] sm:$0x1] %vm683, %v767
    %770 = vst.sshfl [vmem:[#allocation1] sm:$0xff pattern:$0x73625140] %v664
    %s771 = scalar_lea.vmem [#allocation1], 3
    %v772 = vld [vmem:[%s771] ss:$4 sm:$0xff]
    %v773 = vrot.slane %v772, 7
    %v774 = vrot.slane %v773, 2
    %775 = vrot.lane.b32.xlu0 %v774, 96
    %v776 = vpop.permute.xlu0 %775
    %778 = vst.msk [vmem:[#allocation4 + $0x6] sm:$0x1] %vm693, %v776
    %779 = vst.msk [vmem:[#allocation4 + $0x1] sm:$0x1] %vm667, %v665
    %v781 = vrot.slane %v665, 7
    %v782 = vrot.slane %v781, 2
    %783 = vrot.lane.b32.xlu0 %v782, 32
    %v784 = vpop.permute.xlu0 %783
    %786 = vst.msk [vmem:[#allocation4 + $0x1] sm:$0x1] %vm675, %v784
    %787 = vst.sshfl [vmem:[#allocation1] sm:$0xff pattern:$0x73625140] %v665
    %s788 = scalar_lea.vmem [#allocation1], 1
    %v789 = vld [vmem:[%s788] ss:$4 sm:$0xff]
    %790 = vrot.lane.b32.xlu0 %v789, 64
    %v791 = vpop.permute.xlu0 %790
    %793 = vst.msk [vmem:[#allocation4 + $0x1] sm:$0x1] %vm683, %v791
    %794 = vst.sshfl [vmem:[#allocation1] sm:$0xff pattern:$0x73625140] %v665
    %s795 = scalar_lea.vmem [#allocation1], 1
    %v796 = vld [vmem:[%s795] ss:$4 sm:$0xff]
    %v797 = vrot.slane %v796, 7
    %v798 = vrot.slane %v797, 2
    %799 = vrot.lane.b32.xlu0 %v798, 96
    %v800 = vpop.permute.xlu0 %799
    %802 = vst.msk [vmem:[#allocation4 + $0x1] sm:$0x1] %vm693, %v800
    %803 = vst.sshfl [vmem:[#allocation1] sm:$0xff pattern:$0x73625140] %v665
    %s804 = scalar_lea.vmem [#allocation1], 2
    %v805 = vld [vmem:[%s804] ss:$4 sm:$0xff]
    %807 = vst.msk [vmem:[#allocation4 + $0x3] sm:$0x1] %vm667, %v805
    %808 = vst.sshfl [vmem:[#allocation1] sm:$0xff pattern:$0x73625140] %v665
    %s809 = scalar_lea.vmem [#allocation1], 2
    %v810 = vld [vmem:[%s809] ss:$4 sm:$0xff]
    %v811 = vrot.slane %v810, 7
    %v812 = vrot.slane %v811, 2
    %813 = vrot.lane.b32.xlu0 %v812, 32
    %v814 = vpop.permute.xlu0 %813
    %816 = vst.msk [vmem:[#allocation4 + $0x3] sm:$0x1] %vm675, %v814
    %817 = vst.sshfl [vmem:[#allocation1] sm:$0xff pattern:$0x73625140] %v665
    %s818 = scalar_lea.vmem [#allocation1], 3
    %v819 = vld [vmem:[%s818] ss:$4 sm:$0xff]
    %820 = vrot.lane.b32.xlu0 %v819, 64
    %v821 = vpop.permute.xlu0 %820
    %823 = vst.msk [vmem:[#allocation4 + $0x3] sm:$0x1] %vm683, %v821
    %824 = vst.sshfl [vmem:[#allocation1] sm:$0xff pattern:$0x73625140] %v665
    %s825 = scalar_lea.vmem [#allocation1], 3
    %v826 = vld [vmem:[%s825] ss:$4 sm:$0xff]
    %v827 = vrot.slane %v826, 7
    %v828 = vrot.slane %v827, 2
    %829 = vrot.lane.b32.xlu0 %v828, 96
    %v830 = vpop.permute.xlu0 %829
    %832 = vst.msk [vmem:[#allocation4 + $0x3] sm:$0x1] %vm693, %v830
    %833 = vst.msk [vmem:[#allocation4 + $0x5] sm:$0x1] %vm667, %v666
    %v835 = vrot.slane %v666, 7
    %v836 = vrot.slane %v835, 2
    %837 = vrot.lane.b32.xlu0 %v836, 32
    %v838 = vpop.permute.xlu0 %837
    %840 = vst.msk [vmem:[#allocation4 + $0x5] sm:$0x1] %vm675, %v838
    %841 = vst.sshfl [vmem:[#allocation1] sm:$0xff pattern:$0x73625140] %v666
    %s842 = scalar_lea.vmem [#allocation1], 1
    %v843 = vld [vmem:[%s842] ss:$4 sm:$0xff]
    %844 = vrot.lane.b32.xlu0 %v843, 64
    %v845 = vpop.permute.xlu0 %844
    %847 = vst.msk [vmem:[#allocation4 + $0x5] sm:$0x1] %vm683, %v845
    %848 = vst.sshfl [vmem:[#allocation1] sm:$0xff pattern:$0x73625140] %v666
    %s849 = scalar_lea.vmem [#allocation1], 1
    %v850 = vld [vmem:[%s849] ss:$4 sm:$0xff]
    %v851 = vrot.slane %v850, 7
    %v852 = vrot.slane %v851, 2
    %853 = vrot.lane.b32.xlu0 %v852, 96
    %v854 = vpop.permute.xlu0 %853
    %856 = vst.msk [vmem:[#allocation4 + $0x5] sm:$0x1] %vm693, %v854
    %857 = vst.sshfl [vmem:[#allocation1] sm:$0xff pattern:$0x73625140] %v666
    %s858 = scalar_lea.vmem [#allocation1], 2
    %v859 = vld [vmem:[%s858] ss:$4 sm:$0xff]
    %861 = vst.msk [vmem:[#allocation4 + $0x7] sm:$0x1] %vm667, %v859
    %862 = vst.sshfl [vmem:[#allocation1] sm:$0xff pattern:$0x73625140] %v666
    %s863 = scalar_lea.vmem [#allocation1], 2
    %v864 = vld [vmem:[%s863] ss:$4 sm:$0xff]
    %v865 = vrot.slane %v864, 7
    %v866 = vrot.slane %v865, 2
    %867 = vrot.lane.b32.xlu0 %v866, 32
    %v868 = vpop.permute.xlu0 %867
    %870 = vst.msk [vmem:[#allocation4 + $0x7] sm:$0x1] %vm675, %v868
    %871 = vst.sshfl [vmem:[#allocation1] sm:$0xff pattern:$0x73625140] %v666
    %s872 = scalar_lea.vmem [#allocation1], 3
    %v873 = vld [vmem:[%s872] ss:$4 sm:$0xff]
    %874 = vrot.lane.b32.xlu0 %v873, 64
    %v875 = vpop.permute.xlu0 %874
    %877 = vst.msk [vmem:[#allocation4 + $0x7] sm:$0x1] %vm683, %v875
    %878 = vst.sshfl [vmem:[#allocation1] sm:$0xff pattern:$0x73625140] %v666
    %s879 = scalar_lea.vmem [#allocation1], 3
    %v880 = vld [vmem:[%s879] ss:$4 sm:$0xff]
    %v881 = vrot.slane %v880, 7
    %v882 = vrot.slane %v881, 2
    %883 = vrot.lane.b32.xlu0 %v882, 96
    %v884 = vpop.permute.xlu0 %883
    %886 = vst.msk [vmem:[#allocation4 + $0x7] sm:$0x1] %vm693, %v884
    %v887 = vld [vmem:[#allocation4] sm:$0xff]
    %v888 = vld [vmem:[#allocation6] sm:$0xff]
    %v889 = vld [vmem:[#allocation6 + $0x8] sm:$0xff]
    %v890 = vld [vmem:[#allocation6 + $0x10] sm:$0xff]
    %v891 = vld [vmem:[#allocation6 + $0x18] sm:$0xff]
    %v892 = vld [vmem:[#allocation6 + $0x20] sm:$0xff]
    %v893 = vld [vmem:[#allocation6 + $0x28] sm:$0xff]
    %v894 = vld [vmem:[#allocation6 + $0x30] sm:$0xff]
    %v895 = vld [vmem:[#allocation6 + $0x38] sm:$0xff]
    %v896 = vld [vmem:[#allocation6 + $0x40] sm:$0xff]
    %v897 = vld [vmem:[#allocation6 + $0x48] sm:$0xff]
    %v898 = vld [vmem:[#allocation6 + $0x50] sm:$0xff]
    %v899 = vld [vmem:[#allocation6 + $0x58] sm:$0xff]
    %v900 = vld [vmem:[#allocation6 + $0x60] sm:$0xff]
    %v901 = vld [vmem:[#allocation6 + $0x68] sm:$0xff]
    %v902 = vld [vmem:[#allocation6 + $0x70] sm:$0xff]
    %v903 = vld [vmem:[#allocation6 + $0x78] sm:$0xff]
    %v904 = vld [vmem:[#allocation6 + $0x80] sm:$0xff]
    %v905 = vld [vmem:[#allocation6 + $0x88] sm:$0xff]
    %v906 = vld [vmem:[#allocation6 + $0x90] sm:$0xff]
    %v907 = vld [vmem:[#allocation6 + $0x98] sm:$0xff]
    %v908 = vld [vmem:[#allocation6 + $0xa0] sm:$0xff]
    %v909 = vld [vmem:[#allocation6 + $0xa8] sm:$0xff]
    %v910 = vld [vmem:[#allocation6 + $0xb0] sm:$0xff]
    %v911 = vld [vmem:[#allocation6 + $0xb8] sm:$0xff]
    %v912 = vld [vmem:[#allocation6 + $0xc0] sm:$0xff]
    %v913 = vld [vmem:[#allocation6 + $0xc8] sm:$0xff]
    %v914 = vld [vmem:[#allocation6 + $0xd0] sm:$0xff]
    %v915 = vld [vmem:[#allocation6 + $0xd8] sm:$0xff]
    %v916 = vld [vmem:[#allocation6 + $0xe0] sm:$0xff]
    %v917 = vld [vmem:[#allocation6 + $0xe8] sm:$0xff]
    %v918 = vld [vmem:[#allocation6 + $0xf0] sm:$0xff]
    %v919 = vld [vmem:[#allocation6 + $0xf8] sm:$0xff]
    %v920 = vld [vmem:[#allocation6 + $0x100] sm:$0xff]
    %v921 = vld [vmem:[#allocation6 + $0x108] sm:$0xff]
    %v922 = vld [vmem:[#allocation6 + $0x110] sm:$0xff]
    %v923 = vld [vmem:[#allocation6 + $0x118] sm:$0xff]
    %v924 = vld [vmem:[#allocation6 + $0x120] sm:$0xff]
    %v925 = vld [vmem:[#allocation6 + $0x128] sm:$0xff]
    %v926 = vld [vmem:[#allocation6 + $0x130] sm:$0xff]
    %v927 = vld [vmem:[#allocation6 + $0x138] sm:$0xff]
    %v928 = vld [vmem:[#allocation6 + $0x140] sm:$0xff]
    %v929 = vld [vmem:[#allocation6 + $0x148] sm:$0xff]
    %v930 = vld [vmem:[#allocation6 + $0x150] sm:$0xff]
    %v931 = vld [vmem:[#allocation6 + $0x158] sm:$0xff]
    %v932 = vld [vmem:[#allocation6 + $0x160] sm:$0xff]
    %v933 = vld [vmem:[#allocation6 + $0x168] sm:$0xff]
    %v934 = vld [vmem:[#allocation6 + $0x170] sm:$0xff]
    %v935 = vld [vmem:[#allocation6 + $0x178] sm:$0xff]
    %v936 = vld [vmem:[#allocation6 + $0x180] sm:$0xff]
    %v937 = vld [vmem:[#allocation6 + $0x188] sm:$0xff]
    %v938 = vld [vmem:[#allocation6 + $0x190] sm:$0xff]
    %v939 = vld [vmem:[#allocation6 + $0x198] sm:$0xff]
    %v940 = vld [vmem:[#allocation6 + $0x1a0] sm:$0xff]
    %v941 = vld [vmem:[#allocation6 + $0x1a8] sm:$0xff]
    %v942 = vld [vmem:[#allocation6 + $0x1b0] sm:$0xff]
    %v943 = vld [vmem:[#allocation6 + $0x1b8] sm:$0xff]
    %v944 = vld [vmem:[#allocation6 + $0x1c0] sm:$0xff]
    %v945 = vld [vmem:[#allocation6 + $0x1c8] sm:$0xff]
    %v946 = vld [vmem:[#allocation6 + $0x1d0] sm:$0xff]
    %v947 = vld [vmem:[#allocation6 + $0x1d8] sm:$0xff]
    %v948 = vld [vmem:[#allocation6 + $0x1e0] sm:$0xff]
    %v949 = vld [vmem:[#allocation6 + $0x1e8] sm:$0xff]
    %v950 = vld [vmem:[#allocation6 + $0x1f0] sm:$0xff]
    %v951 = vld [vmem:[#allocation6 + $0x1f8] sm:$0xff]
    %v952 = vld [vmem:[%s11] sm:$0x1]
    %v954 = vperm.slane %v952, 0
    %957 = vst [vmem:[#allocation1] ss:$4 sm:$0xff] %v887
    %v958 = vld.sshfl [vmem:[#allocation1] sm:$0xff pattern:$0x73625140]
    %v959 = vld.sshfl [vmem:[#allocation1 + $0x8] sm:$0xff pattern:$0x73625140]
    %v960 = vld.sshfl [vmem:[#allocation1 + $0x10] sm:$0xff pattern:$0x73625140]
    %v961 = vld.sshfl [vmem:[#allocation1 + $0x18] sm:$0xff pattern:$0x73625140]
    %966 = vmatpush.msra.mxu0 %v903
    %967 = vmatpush.msra.mxu0 %v902
    %968 = vmatpush.msra.mxu0 %v901
    %969 = vmatpush.msra.mxu0 %v900
    %970 = vmatpush.msra.mxu0 %v899
    %971 = vmatpush.msra.mxu0 %v898
    %972 = vmatpush.msra.mxu0 %v897
    %973 = vmatpush.msra.mxu0 %v896
    %974 = vmatpush.msra.mxu0 %v895
    %975 = vmatpush.msra.mxu0 %v894
    %976 = vmatpush.msra.mxu0 %v893
    %977 = vmatpush.msra.mxu0 %v892
    %978 = vmatpush.msra.mxu0 %v891
    %979 = vmatpush.msra.mxu0 %v890
    %980 = vmatpush.msra.mxu0 %v889
    %981 = vmatpush.msra.mxu0 %v888
    %982 = vmatmul.f32.gmra.mxu0 %v958
    %v983 = vpop.f32.mrf.mxu0
    %v984 = vadd.f32 %v954, %v983
    %985 = vdwg.mxu0
    %986 = vmatpush.msra.mxu0 %v919
    %987 = vmatpush.msra.mxu0 %v918
    %988 = vmatpush.msra.mxu0 %v917
    %989 = vmatpush.msra.mxu0 %v916
    %990 = vmatpush.msra.mxu0 %v915
    %991 = vmatpush.msra.mxu0 %v914
    %992 = vmatpush.msra.mxu0 %v913
    %993 = vmatpush.msra.mxu0 %v912
    %994 = vmatpush.msra.mxu0 %v911
    %995 = vmatpush.msra.mxu0 %v910
    %996 = vmatpush.msra.mxu0 %v909
    %997 = vmatpush.msra.mxu0 %v908
    %998 = vmatpush.msra.mxu0 %v907
    %999 = vmatpush.msra.mxu0 %v906
    %1000 = vmatpush.msra.mxu0 %v905
    %1001 = vmatpush.msra.mxu0 %v904
    %1002 = vmatmul.f32.gmra.mxu0 %v959
    %v1003 = vpop.f32.mrf.mxu0
    %v1004 = vadd.f32 %v984, %v1003
    %1005 = vdwg.mxu0
    %1006 = vmatpush.msra.mxu0 %v935
    %1007 = vmatpush.msra.mxu0 %v934
    %1008 = vmatpush.msra.mxu0 %v933
    %1009 = vmatpush.msra.mxu0 %v932
    %1010 = vmatpush.msra.mxu0 %v931
    %1011 = vmatpush.msra.mxu0 %v930
    %1012 = vmatpush.msra.mxu0 %v929
    %1013 = vmatpush.msra.mxu0 %v928
    %1014 = vmatpush.msra.mxu0 %v927
    %1015 = vmatpush.msra.mxu0 %v926
    %1016 = vmatpush.msra.mxu0 %v925
    %1017 = vmatpush.msra.mxu0 %v924
    %1018 = vmatpush.msra.mxu0 %v923
    %1019 = vmatpush.msra.mxu0 %v922
    %1020 = vmatpush.msra.mxu0 %v921
    %1021 = vmatpush.msra.mxu0 %v920
    %1022 = vmatmul.f32.gmra.mxu0 %v960
    %v1023 = vpop.f32.mrf.mxu0
    %v1024 = vadd.f32 %v1004, %v1023
    %1025 = vdwg.mxu0
    %1026 = vmatpush.msra.mxu0 %v951
    %1027 = vmatpush.msra.mxu0 %v950
    %1028 = vmatpush.msra.mxu0 %v949
    %1029 = vmatpush.msra.mxu0 %v948
    %1030 = vmatpush.msra.mxu0 %v947
    %1031 = vmatpush.msra.mxu0 %v946
    %1032 = vmatpush.msra.mxu0 %v945
    %1033 = vmatpush.msra.mxu0 %v944
    %1034 = vmatpush.msra.mxu0 %v943
    %1035 = vmatpush.msra.mxu0 %v942
    %1036 = vmatpush.msra.mxu0 %v941
    %1037 = vmatpush.msra.mxu0 %v940
    %1038 = vmatpush.msra.mxu0 %v939
    %1039 = vmatpush.msra.mxu0 %v938
    %1040 = vmatpush.msra.mxu0 %v937
    %1041 = vmatpush.msra.mxu0 %v936
    %1042 = vmatmul.f32.gmra.mxu0 %v961
    %v1043 = vpop.f32.mrf.mxu0
    %v1044 = vadd.f32 %v1024, %v1043
    %1045 = vdwg.mxu0
    %v1046 = vmax.f32 %v1044, 0.0
    %v1047 = vld [vmem:[%s12] sm:$0xff]
    %v1048 = vld [vmem:[%s12 + $0x8] sm:$0xff]
    %v1049 = vld [vmem:[%s12 + $0x10] sm:$0xff]
    %v1050 = vld [vmem:[%s12 + $0x18] sm:$0xff]
    %v1051 = vld [vmem:[%s12 + $0x20] sm:$0xff]
    %v1052 = vld [vmem:[%s12 + $0x28] sm:$0xff]
    %v1053 = vld [vmem:[%s12 + $0x30] sm:$0xff]
    %v1054 = vld [vmem:[%s12 + $0x38] sm:$0xff]
    %v1055 = vld [vmem:[%s12 + $0x40] sm:$0xff]
    %v1056 = vld [vmem:[%s12 + $0x48] sm:$0xff]
    %v1057 = vld [vmem:[%s12 + $0x50] sm:$0xff]
    %v1058 = vld [vmem:[%s12 + $0x58] sm:$0xff]
    %v1059 = vld [vmem:[%s12 + $0x60] sm:$0xff]
    %v1060 = vld [vmem:[%s12 + $0x68] sm:$0xff]
    %v1061 = vld [vmem:[%s12 + $0x70] sm:$0xff]
    %v1062 = vld [vmem:[%s12 + $0x78] sm:$0xff]
    %v1063 = vld [vmem:[#allocation5] sm:$0x1]
    %v1065 = vperm.slane %v1063, 0
    %1067 = vmatpush.msra.mxu0 %v1062
    %1068 = vmatpush.msra.mxu0 %v1061
    %1069 = vmatpush.msra.mxu0 %v1060
    %1070 = vmatpush.msra.mxu0 %v1059
    %1071 = vmatpush.msra.mxu0 %v1058
    %1072 = vmatpush.msra.mxu0 %v1057
    %1073 = vmatpush.msra.mxu0 %v1056
    %1074 = vmatpush.msra.mxu0 %v1055
    %1075 = vmatpush.msra.mxu0 %v1054
    %1076 = vmatpush.msra.mxu0 %v1053
    %1077 = vmatpush.msra.mxu0 %v1052
    %1078 = vmatpush.msra.mxu0 %v1051
    %1079 = vmatpush.msra.mxu0 %v1050
    %1080 = vmatpush.msra.mxu0 %v1049
    %1081 = vmatpush.msra.mxu0 %v1048
    %1082 = vmatpush.msra.mxu0 %v1047
    %1083 = vmatmul.f32.gmra.mxu0 %v1046
    %v1084 = vpop.f32.mrf.mxu0
    %v1085 = vadd.f32 %v1065, %v1084
    %1086 = vdwg.mxu0
    %vm1087 = vcmask 1024
    %1088 = vst.msk [vmem:[%s14] sm:$0x3] %vm1087, %v1085
    // Predicated region
    $region62: #{tempcnn_forward.1} parent=1 // pred_check
      _
    $region63: #{tempcnn_forward.1} parent=1 // pred_check_branch
      %1090 = sbr.rel (0) target = $region65
    $region64: #{tempcnn_forward.1} parent=1 // pred_region
      _
    $region65: #{tempcnn_forward.1} parent=1 // pred_fallthru
      _
    // Predicated region
    $region66: #{tempcnn_forward.1} parent=1 // pred_check
      _
    $region67: #{tempcnn_forward.1} parent=1 // pred_check_branch
      %1092 = sbr.rel (0) target = $region69
    $region68: #{tempcnn_forward.1} parent=1 // pred_region
      _
    $region69: #{tempcnn_forward.1} parent=1 // pred_fallthru
      _
    %1093 = vsyncpa [#allocation7], 1

</llo_original>
